<compile_context>
chip_gen: v7x
topology: tpu7x:2x2x1
jax: 0.10.0
libtpu: 0.0.40
codegen_flags: <defaults>
</compile_context>

<pallas_src>
import jax
import jax.numpy as jnp
from jax.experimental import pallas as pl
from jax.experimental.pallas import tpu as pltpu  # used for TODO scaling path (CompilerParams)


# ---------------------------------------------------------------------------
# Model hyper-parameters (small, consistent with the module's forward)
# ---------------------------------------------------------------------------
B = 2          # batch
S = 8          # sequence length
D = 32         # input_dim
H = 4          # num_heads
HD = D // H    # head dim
L = 64         # latent_dim (FFN hidden)
EPS = 1e-5     # nn.LayerNorm default eps

# MXU operand dtype. bf16 halves weight DMA bytes and runs the MXU at native
# bf16 rate on all three generations; accumulation is f32 via
# preferred_element_type, and LayerNorm / softmax elementwise math stays f32.
MM_DTYPE = jnp.bfloat16


# ---------------------------------------------------------------------------
# Pallas kernel: full transformer layer, whole batch in one invocation
# ---------------------------------------------------------------------------
def transformer_layer_kernel(
    x_ref,                 # (B*S, D)   f32
    wqkv_ref, bqkv_ref,    # (D, 3D) bf16 (Q cols pre-scaled by 1/sqrt(HD)), (1, 3D) f32
    wo_ref, bo_ref,        # (D, D) bf16, (1, D) f32
    w1_ref, b1_ref,        # (D, L) bf16, (1, L) f32
    w2_ref, b2_ref,        # (L, D) bf16, (1, D) f32
    g1_ref, be1_ref,       # (1, D) f32, (1, D) f32
    g2_ref, be2_ref,       # (1, D) f32, (1, D) f32
    o_ref,                 # (B*S, D)
):
    f32 = jnp.float32
    x = x_ref[...].astype(f32)                                        # (BS, D)

    # ---- fused QKV projection (single MXU op, bf16 operands, f32 acc) ------
    qkv = jnp.dot(x.astype(MM_DTYPE), wqkv_ref[...],
                  preferred_element_type=f32) + bqkv_ref[...]         # (BS, 3D)

    # Split qkv once into q/k/v (3 slices at 32-lane offsets).
    q2d = qkv[:, 0 * D:1 * D]                                         # (BS, D), pre-scaled
    k2d = qkv[:, 1 * D:2 * D]
    v2d = qkv[:, 2 * D:3 * D]

    # Stack heads along the leading axis -> (H*B, S, HD), so scores / softmax /
    # context each run ONCE as a single-batch-dim batched op (the form Mosaic
    # lowers efficiently).  All reshapes here only split/merge leading dims.
    def stack_heads(t2d):
        return jnp.concatenate(
            [t2d[:, h * HD:(h + 1) * HD].reshape(B, S, HD) for h in range(H)],
            axis=0)

    q_s = stack_heads(q2d).astype(MM_DTYPE)                           # (H*B, S, HD)
    k_s = stack_heads(k2d).astype(MM_DTYPE)
    v_s = stack_heads(v2d).astype(MM_DTYPE)

    # ---- multi-head self-attention: one scores matmul, one softmax, one PV --
    # TODO(synk): optional attention mask argument is not implemented (mask=None path).
    s = jnp.einsum("nqd,nkd->nqk", q_s, k_s,
                   preferred_element_type=f32)                        # (H*B, S, S)
    s = s - jnp.max(s, axis=-1, keepdims=True)
    p = jnp.exp(s)
    p = p * pl.reciprocal(jnp.sum(p, axis=-1, keepdims=True), approx=True)

    ctx = jnp.einsum("nqk,nkd->nqd", p.astype(MM_DTYPE), v_s,
                     preferred_element_type=f32)                      # (H*B, S, HD)

    # Re-assemble heads along lanes -> (BS, D), then ONE K=32 output projection.
    ctx2d = jnp.concatenate(
        [ctx[h * B:(h + 1) * B].reshape(B * S, HD) for h in range(H)], axis=1)
    attn = jnp.dot(ctx2d.astype(MM_DTYPE), wo_ref[...],
                   preferred_element_type=f32) + bo_ref[...]          # (BS, D)

    # ---- LayerNorm helper (var = E[z^2] - mu^2, f32 throughout) ------------
    def layer_norm(z, g, be):
        mu = jnp.mean(z, axis=-1, keepdims=True)
        var = jnp.mean(z * z, axis=-1, keepdims=True) - mu * mu
        return (z - mu) * jax.lax.rsqrt(var + EPS) * g + be

    # ---- residual + LayerNorm 1 (dropout1 = identity in eval) --------------
    net = layer_norm(x + attn, g1_ref[...], be1_ref[...])

    # ---- feed-forward: from_latent(ReLU(to_latent(net))) -------------------
    h1 = jnp.dot(net.astype(MM_DTYPE), w1_ref[...],
                 preferred_element_type=f32) + b1_ref[...]
    h1 = jnp.maximum(h1, 0.0)                                         # ReLU
    ff = jnp.dot(h1.astype(MM_DTYPE), w2_ref[...],
                 preferred_element_type=f32) + b2_ref[...]

    # ---- residual + LayerNorm 2 (dropout2 = identity in eval) --------------
    net = layer_norm(net + ff, g2_ref[...], be2_ref[...])

    o_ref[...] = net.astype(o_ref.dtype)


# ---------------------------------------------------------------------------
# One-time host-side parameter preparation (fuse QKV, fold softmax scale,
# cast matmul weights to bf16).  Call once, reuse across calls.
# ---------------------------------------------------------------------------
def prepare_params(params):
    (wq, bq, wk, bk, wv, bv, wo, bo, w1, b1, w2, b2, g1, be1, g2, be2) = params
    scale = 1.0 / jnp.sqrt(jnp.float32(HD))
    wqkv = jnp.concatenate([wq * scale, wk, wv], axis=1).astype(MM_DTYPE)   # (D, 3D)
    bqkv = jnp.concatenate([bq * scale, bk, bv], axis=1).astype(jnp.float32)  # (1, 3D)
    return (wqkv, bqkv,
            wo.astype(MM_DTYPE), bo.astype(jnp.float32),
            w1.astype(MM_DTYPE), b1.astype(jnp.float32),
            w2.astype(MM_DTYPE), b2.astype(jnp.float32),
            g1.astype(jnp.float32), be1.astype(jnp.float32),
            g2.astype(jnp.float32), be2.astype(jnp.float32))


# ---------------------------------------------------------------------------
# Per-call wrapper: reshape + single pallas_call (no grid at toy size)
# ---------------------------------------------------------------------------
@jax.jit
def transformer_layer(x, fused_params):
    x2d = x.reshape(B * S, D)   # flatten batch*seq for projections/attention/FFN/LN
    out2d = pl.pallas_call(
        transformer_layer_kernel,
        out_shape=jax.ShapeDtypeStruct((B * S, D), x.dtype),
        # No grid: the whole 16x32 problem runs in one invocation on one core;
        # all operands (<100 KiB) fit trivially in VMEM on v5e/v6e/v7x.
        # TODO(synk): at realistic shapes (S in the thousands, D >= 512) add
        #   grid=(pl.cdiv(B*S, TM),) with dimension_semantics=("parallel",) so
        #   both v7x TensorCores run; give weights/biases/LN params BlockSpecs
        #   with index_map lambda i: (0, 0) (resident) and stream only the
        #   x/out (TM, D) tiles (index_map lambda i: (i, 0), optionally
        #   pl.Buffered(2-3)); size tiles against v7x's 64 MiB VMEM via
        #   pltpu.CompilerParams(vmem_limit_bytes=...), ~2x larger on v6e, and
        #   switch attention to flash-style S-tiling.
    )(x2d, *fused_params)
    return out2d.reshape(B, S, D)


# ---------------------------------------------------------------------------
# Pure-JAX references
#   reference        : faithful f32 math of the PyTorch module (eval mode)
#   reference_fused  : same bf16-at-MXU math as the kernel (exact softmax),
#                      used for a tight correctness check of the kernel itself
# ---------------------------------------------------------------------------
def reference(x, params):
    (wq, bq, wk, bk, wv, bv, wo, bo, w1, b1, w2, b2, g1, be1, g2, be2) = params

    def ln(z, g, be):
        mu = jnp.mean(z, axis=-1, keepdims=True)
        var = jnp.mean((z - mu) ** 2, axis=-1, keepdims=True)
        return (z - mu) / jnp.sqrt(var + EPS) * g + be

    q = x @ wq + bq
    k = x @ wk + bk
    v = x @ wv + bv
    qh = q.reshape(B, S, H, HD).transpose(0, 2, 1, 3)
    kh = k.reshape(B, S, H, HD).transpose(0, 2, 1, 3)
    vh = v.reshape(B, S, H, HD).transpose(0, 2, 1, 3)
    s = jnp.einsum("bhqd,bhkd->bhqk", qh, kh) / jnp.sqrt(jnp.float32(HD))
    p = jax.nn.softmax(s, axis=-1)
    a = jnp.einsum("bhqk,bhkd->bhqd", p, vh).transpose(0, 2, 1, 3).reshape(B, S, D)
    a = a @ wo + bo
    net = ln(x + a, g1, be1)
    ff = jnp.maximum(net @ w1 + b1, 0.0) @ w2 + b2
    return ln(net + ff, g2, be2)


def reference_fused(x, fused_params):
    (wqkv, bqkv, wo, bo, w1, b1, w2, b2, g1, be1, g2, be2) = fused_params
    f32 = jnp.float32

    def mm(a, w):
        return jnp.dot(a.astype(MM_DTYPE), w, preferred_element_type=f32)

    def ln(z, g, be):
        mu = jnp.mean(z, axis=-1, keepdims=True)
        var = jnp.mean((z - mu) ** 2, axis=-1, keepdims=True)
        return (z - mu) / jnp.sqrt(var + EPS) * g + be

    x2 = x.reshape(B * S, D).astype(f32)
    qkv = mm(x2, wqkv) + bqkv
    q = qkv[:, :D].reshape(B, S, H, HD)
    k = qkv[:, D:2 * D].reshape(B, S, H, HD)
    v = qkv[:, 2 * D:3 * D].reshape(B, S, H, HD)
    s = jnp.einsum("bqhd,bkhd->bhqk", q.astype(MM_DTYPE), k.astype(MM_DTYPE),
                   preferred_element_type=f32)
    p = jax.nn.softmax(s, axis=-1)
    ctx = jnp.einsum("bhqk,bkhd->bqhd", p.astype(MM_DTYPE), v.astype(MM_DTYPE),
                     preferred_element_type=f32).reshape(B * S, D)
    attn = mm(ctx, wo) + bo
    net = ln(x2 + attn, g1, be1)
    ff = mm(jnp.maximum(mm(net, w1) + b1, 0.0), w2) + b2
    net = ln(net + ff, g2, be2)
    return net.reshape(B, S, D)


# ---------------------------------------------------------------------------
# Main
# ---------------------------------------------------------------------------
if __name__ == "__main__":
    key = jax.random.PRNGKey(0)
    keys = jax.random.split(key, 16)

    def init_w(k, shape, fan_in):
        bound = 1.0 / jnp.sqrt(jnp.float32(fan_in))
        return jax.random.uniform(k, shape, jnp.float32, -bound, bound)

    x = jax.random.normal(keys[0], (B, S, D), jnp.float32)

    wq = init_w(keys[1], (D, D), D); bq = init_w(keys[2], (1, D), D)
    wk = init_w(keys[3], (D, D), D); bk = init_w(keys[4], (1, D), D)
    wv = init_w(keys[5], (D, D), D); bv = init_w(keys[6], (1, D), D)
    wo = init_w(keys[7], (D, D), D); bo = init_w(keys[8], (1, D), D)
    w1 = init_w(keys[9], (D, L), D); b1 = init_w(keys[10], (1, L), D)
    w2 = init_w(keys[11], (L, D), L); b2 = init_w(keys[12], (1, D), L)
    g1 = jnp.ones((1, D), jnp.float32); be1 = jnp.zeros((1, D), jnp.float32)
    g2 = jnp.ones((1, D), jnp.float32); be2 = jnp.zeros((1, D), jnp.float32)

    params = (wq, bq, wk, bk, wv, bv, wo, bo, w1, b1, w2, b2, g1, be1, g2, be2)

    fused = prepare_params(params)          # one-time host-side weight prep
    out = transformer_layer(x, fused)
    out = jax.block_until_ready(out)
    assert out.shape == (B, S, D)

    # Tight check: kernel vs. a pure-JAX implementation of the SAME
    # bf16-at-MXU / f32-accumulation math (slack only for the approx
    # reciprocal in softmax and accumulation-order differences).
    ref_mm = reference_fused(x, fused)
    assert jnp.allclose(out, ref_mm, atol=5e-3, rtol=5e-3), "kernel vs fused-math reference mismatch"

    # End-to-end check: kernel vs. the faithful f32 module math; the gap here
    # is bf16 weight/operand quantization, not a kernel bug.
    ref_f32 = reference(x, params)
    assert jnp.allclose(out, ref_f32, atol=6e-2, rtol=6e-2), "kernel vs f32 reference mismatch"

    print("KERNEL_OK")
</pallas_src>

<mosaic_0001>
module attributes {stable_mosaic.version = 11 : i64} {
  func.func @transformer_layer_kernel(%arg0: memref<16x32xf32, #tpu.memory_space<vmem>>, %arg1: memref<32x96xbf16, #tpu.memory_space<vmem>>, %arg2: memref<1x96xf32, #tpu.memory_space<vmem>>, %arg3: memref<32x32xbf16, #tpu.memory_space<vmem>>, %arg4: memref<1x32xf32, #tpu.memory_space<vmem>>, %arg5: memref<32x64xbf16, #tpu.memory_space<vmem>>, %arg6: memref<1x64xf32, #tpu.memory_space<vmem>>, %arg7: memref<64x32xbf16, #tpu.memory_space<vmem>>, %arg8: memref<1x32xf32, #tpu.memory_space<vmem>>, %arg9: memref<1x32xf32, #tpu.memory_space<vmem>>, %arg10: memref<1x32xf32, #tpu.memory_space<vmem>>, %arg11: memref<1x32xf32, #tpu.memory_space<vmem>>, %arg12: memref<1x32xf32, #tpu.memory_space<vmem>>, %arg13: memref<16x32xf32, #tpu.memory_space<vmem>>) attributes {dimension_semantics = [], scalar_prefetch = 0 : i64, scratch_operands = 0 : i64, tpu.core_type = #tpu.core_type<tc>} {
    %c0 = arith.constant 0 : index
    %c0_0 = arith.constant 0 : index
    %0 = vector.load %arg0[%c0, %c0_0] : memref<16x32xf32, #tpu.memory_space<vmem>>, vector<16x32xf32>
    %1 = arith.truncf %0 : vector<16x32xf32> to vector<16x32xbf16>
    %c0_1 = arith.constant 0 : index
    %c0_2 = arith.constant 0 : index
    %2 = vector.load %arg1[%c0_1, %c0_2] : memref<32x96xbf16, #tpu.memory_space<vmem>>, vector<32x96xbf16>
    %cst = arith.constant dense<0.000000e+00> : vector<16x96xf32>
    %3 = tpu.matmul %1, %2, %cst {dimension_numbers = #tpu.dot_dimension_numbers<[1], [0], [0], [1], [0, 0, 1, 1], [], []>} : vector<16x32xbf16>, vector<32x96xbf16>, vector<16x96xf32> -> vector<16x96xf32>
    %c0_3 = arith.constant 0 : index
    %c0_4 = arith.constant 0 : index
    %4 = vector.load %arg2[%c0_3, %c0_4] : memref<1x96xf32, #tpu.memory_space<vmem>>, vector<1x96xf32>
    %5 = vector.broadcast %4 : vector<1x96xf32> to vector<16x96xf32>
    %6 = arith.addf %3, %5 : vector<16x96xf32>
    %7 = vector.extract_strided_slice %6 {offsets = [0, 0], sizes = [16, 32], strides = [1, 1]} : vector<16x96xf32> to vector<16x32xf32>
    %8 = vector.extract_strided_slice %6 {offsets = [0, 32], sizes = [16, 32], strides = [1, 1]} : vector<16x96xf32> to vector<16x32xf32>
    %9 = vector.extract_strided_slice %6 {offsets = [0, 64], sizes = [16, 32], strides = [1, 1]} : vector<16x96xf32> to vector<16x32xf32>
    %10 = vector.extract_strided_slice %7 {offsets = [0, 0], sizes = [16, 8], strides = [1, 1]} : vector<16x32xf32> to vector<16x8xf32>
    %11 = vector.shape_cast %10 : vector<16x8xf32> to vector<2x8x8xf32>
    %12 = vector.extract_strided_slice %7 {offsets = [0, 8], sizes = [16, 8], strides = [1, 1]} : vector<16x32xf32> to vector<16x8xf32>
    %13 = vector.shape_cast %12 : vector<16x8xf32> to vector<2x8x8xf32>
    %14 = vector.extract_strided_slice %7 {offsets = [0, 16], sizes = [16, 8], strides = [1, 1]} : vector<16x32xf32> to vector<16x8xf32>
    %15 = vector.shape_cast %14 : vector<16x8xf32> to vector<2x8x8xf32>
    %16 = vector.extract_strided_slice %7 {offsets = [0, 24], sizes = [16, 8], strides = [1, 1]} : vector<16x32xf32> to vector<16x8xf32>
    %17 = vector.shape_cast %16 : vector<16x8xf32> to vector<2x8x8xf32>
    %18 = tpu.concatenate %11, %13, %15, %17 in 0 : vector<2x8x8xf32>, vector<2x8x8xf32>, vector<2x8x8xf32>, vector<2x8x8xf32> -> vector<8x8x8xf32>
    %19 = arith.truncf %18 : vector<8x8x8xf32> to vector<8x8x8xbf16>
    %20 = vector.extract_strided_slice %8 {offsets = [0, 0], sizes = [16, 8], strides = [1, 1]} : vector<16x32xf32> to vector<16x8xf32>
    %21 = vector.shape_cast %20 : vector<16x8xf32> to vector<2x8x8xf32>
    %22 = vector.extract_strided_slice %8 {offsets = [0, 8], sizes = [16, 8], strides = [1, 1]} : vector<16x32xf32> to vector<16x8xf32>
    %23 = vector.shape_cast %22 : vector<16x8xf32> to vector<2x8x8xf32>
    %24 = vector.extract_strided_slice %8 {offsets = [0, 16], sizes = [16, 8], strides = [1, 1]} : vector<16x32xf32> to vector<16x8xf32>
    %25 = vector.shape_cast %24 : vector<16x8xf32> to vector<2x8x8xf32>
    %26 = vector.extract_strided_slice %8 {offsets = [0, 24], sizes = [16, 8], strides = [1, 1]} : vector<16x32xf32> to vector<16x8xf32>
    %27 = vector.shape_cast %26 : vector<16x8xf32> to vector<2x8x8xf32>
    %28 = tpu.concatenate %21, %23, %25, %27 in 0 : vector<2x8x8xf32>, vector<2x8x8xf32>, vector<2x8x8xf32>, vector<2x8x8xf32> -> vector<8x8x8xf32>
    %29 = arith.truncf %28 : vector<8x8x8xf32> to vector<8x8x8xbf16>
    %30 = vector.extract_strided_slice %9 {offsets = [0, 0], sizes = [16, 8], strides = [1, 1]} : vector<16x32xf32> to vector<16x8xf32>
    %31 = vector.shape_cast %30 : vector<16x8xf32> to vector<2x8x8xf32>
    %32 = vector.extract_strided_slice %9 {offsets = [0, 8], sizes = [16, 8], strides = [1, 1]} : vector<16x32xf32> to vector<16x8xf32>
    %33 = vector.shape_cast %32 : vector<16x8xf32> to vector<2x8x8xf32>
    %34 = vector.extract_strided_slice %9 {offsets = [0, 16], sizes = [16, 8], strides = [1, 1]} : vector<16x32xf32> to vector<16x8xf32>
    %35 = vector.shape_cast %34 : vector<16x8xf32> to vector<2x8x8xf32>
    %36 = vector.extract_strided_slice %9 {offsets = [0, 24], sizes = [16, 8], strides = [1, 1]} : vector<16x32xf32> to vector<16x8xf32>
    %37 = vector.shape_cast %36 : vector<16x8xf32> to vector<2x8x8xf32>
    %38 = tpu.concatenate %31, %33, %35, %37 in 0 : vector<2x8x8xf32>, vector<2x8x8xf32>, vector<2x8x8xf32>, vector<2x8x8xf32> -> vector<8x8x8xf32>
    %39 = arith.truncf %38 : vector<8x8x8xf32> to vector<8x8x8xbf16>
    "tpu.trace_start"() <{level = 10 : i32, message = "nqd,nkd->nqk"}> : () -> ()
    %cst_5 = arith.constant dense<0.000000e+00> : vector<8x8x8xf32>
    %40 = tpu.matmul %19, %29, %cst_5 {dimension_numbers = #tpu.dot_dimension_numbers<[2], [2], [1], [1], [0, 0, 0, 1, 1, 1], [0], [0]>} : vector<8x8x8xbf16>, vector<8x8x8xbf16>, vector<8x8x8xf32> -> vector<8x8x8xf32>
    "tpu.trace_stop"() : () -> ()
    %cst_6 = arith.constant dense<0xFF800000> : vector<8x8xf32>
    %41 = vector.multi_reduction <maximumf>, %40, %cst_6 [2] : vector<8x8x8xf32> to vector<8x8xf32>
    %42 = vector.shape_cast %41 : vector<8x8xf32> to vector<8x8x1xf32>
    %43 = vector.broadcast %42 : vector<8x8x1xf32> to vector<8x8x8xf32>
    %44 = arith.subf %40, %43 : vector<8x8x8xf32>
    %45 = math.exp %44 : vector<8x8x8xf32>
    %cst_7 = arith.constant dense<0.000000e+00> : vector<8x8xf32>
    %46 = vector.multi_reduction <add>, %45, %cst_7 [2] : vector<8x8x8xf32> to vector<8x8xf32>
    %47 = vector.shape_cast %46 : vector<8x8xf32> to vector<8x8x1xf32>
    %48 = tpu.reciprocal %47 {approx = true} : vector<8x8x1xf32> -> vector<8x8x1xf32>
    %49 = vector.broadcast %48 : vector<8x8x1xf32> to vector<8x8x8xf32>
    %50 = arith.mulf %45, %49 : vector<8x8x8xf32>
    %51 = arith.truncf %50 : vector<8x8x8xf32> to vector<8x8x8xbf16>
    "tpu.trace_start"() <{level = 10 : i32, message = "nqk,nkd->nqd"}> : () -> ()
    %cst_8 = arith.constant dense<0.000000e+00> : vector<8x8x8xf32>
    %52 = tpu.matmul %51, %39, %cst_8 {dimension_numbers = #tpu.dot_dimension_numbers<[2], [1], [1], [2], [0, 0, 0, 1, 1, 2], [0], [0]>} : vector<8x8x8xbf16>, vector<8x8x8xbf16>, vector<8x8x8xf32> -> vector<8x8x8xf32>
    "tpu.trace_stop"() : () -> ()
    %53 = vector.extract_strided_slice %52 {offsets = [0, 0, 0], sizes = [2, 8, 8], strides = [1, 1, 1]} : vector<8x8x8xf32> to vector<2x8x8xf32>
    %54 = vector.shape_cast %53 : vector<2x8x8xf32> to vector<16x8xf32>
    %55 = vector.extract_strided_slice %52 {offsets = [2, 0, 0], sizes = [2, 8, 8], strides = [1, 1, 1]} : vector<8x8x8xf32> to vector<2x8x8xf32>
    %56 = vector.shape_cast %55 : vector<2x8x8xf32> to vector<16x8xf32>
    %57 = vector.extract_strided_slice %52 {offsets = [4, 0, 0], sizes = [2, 8, 8], strides = [1, 1, 1]} : vector<8x8x8xf32> to vector<2x8x8xf32>
    %58 = vector.shape_cast %57 : vector<2x8x8xf32> to vector<16x8xf32>
    %59 = vector.extract_strided_slice %52 {offsets = [6, 0, 0], sizes = [2, 8, 8], strides = [1, 1, 1]} : vector<8x8x8xf32> to vector<2x8x8xf32>
    %60 = vector.shape_cast %59 : vector<2x8x8xf32> to vector<16x8xf32>
    %61 = tpu.concatenate %54, %56, %58, %60 in 1 : vector<16x8xf32>, vector<16x8xf32>, vector<16x8xf32>, vector<16x8xf32> -> vector<16x32xf32>
    %62 = arith.truncf %61 : vector<16x32xf32> to vector<16x32xbf16>
    %c0_9 = arith.constant 0 : index
    %c0_10 = arith.constant 0 : index
    %63 = vector.load %arg3[%c0_9, %c0_10] : memref<32x32xbf16, #tpu.memory_space<vmem>>, vector<32x32xbf16>
    %cst_11 = arith.constant dense<0.000000e+00> : vector<16x32xf32>
    %64 = tpu.matmul %62, %63, %cst_11 {dimension_numbers = #tpu.dot_dimension_numbers<[1], [0], [0], [1], [0, 0, 1, 1], [], []>} : vector<16x32xbf16>, vector<32x32xbf16>, vector<16x32xf32> -> vector<16x32xf32>
    %c0_12 = arith.constant 0 : index
    %c0_13 = arith.constant 0 : index
    %65 = vector.load %arg4[%c0_12, %c0_13] : memref<1x32xf32, #tpu.memory_space<vmem>>, vector<1x32xf32>
    %66 = vector.broadcast %65 : vector<1x32xf32> to vector<16x32xf32>
    %67 = arith.addf %64, %66 : vector<16x32xf32>
    %68 = arith.addf %0, %67 : vector<16x32xf32>
    %c0_14 = arith.constant 0 : index
    %c0_15 = arith.constant 0 : index
    %69 = vector.load %arg9[%c0_14, %c0_15] : memref<1x32xf32, #tpu.memory_space<vmem>>, vector<1x32xf32>
    %c0_16 = arith.constant 0 : index
    %c0_17 = arith.constant 0 : index
    %70 = vector.load %arg10[%c0_16, %c0_17] : memref<1x32xf32, #tpu.memory_space<vmem>>, vector<1x32xf32>
    %cst_18 = arith.constant dense<0.000000e+00> : vector<16xf32>
    %71 = vector.multi_reduction <add>, %68, %cst_18 [1] : vector<16x32xf32> to vector<16xf32>
    %72 = vector.shape_cast %71 : vector<16xf32> to vector<16x1xf32>
    %cst_19 = arith.constant 3.200000e+01 : f32
    %73 = vector.broadcast %cst_19 : f32 to vector<16x1xf32>
    %74 = arith.divf %72, %73 : vector<16x1xf32>
    %75 = arith.mulf %68, %68 : vector<16x32xf32>
    %cst_20 = arith.constant dense<0.000000e+00> : vector<16xf32>
    %76 = vector.multi_reduction <add>, %75, %cst_20 [1] : vector<16x32xf32> to vector<16xf32>
    %77 = vector.shape_cast %76 : vector<16xf32> to vector<16x1xf32>
    %cst_21 = arith.constant 3.200000e+01 : f32
    %78 = vector.broadcast %cst_21 : f32 to vector<16x1xf32>
    %79 = arith.divf %77, %78 : vector<16x1xf32>
    %80 = arith.mulf %74, %74 : vector<16x1xf32>
    %81 = arith.subf %79, %80 : vector<16x1xf32>
    %82 = vector.broadcast %74 : vector<16x1xf32> to vector<16x32xf32>
    %83 = arith.subf %68, %82 : vector<16x32xf32>
    %cst_22 = arith.constant 9.99999974E-6 : f32
    %84 = vector.broadcast %cst_22 : f32 to vector<16x1xf32>
    %85 = arith.addf %81, %84 : vector<16x1xf32>
    %86 = math.rsqrt %85 : vector<16x1xf32>
    %87 = vector.broadcast %86 : vector<16x1xf32> to vector<16x32xf32>
    %88 = arith.mulf %83, %87 : vector<16x32xf32>
    %89 = vector.broadcast %69 : vector<1x32xf32> to vector<16x32xf32>
    %90 = arith.mulf %88, %89 : vector<16x32xf32>
    %91 = vector.broadcast %70 : vector<1x32xf32> to vector<16x32xf32>
    %92 = arith.addf %90, %91 : vector<16x32xf32>
    %93 = arith.truncf %92 : vector<16x32xf32> to vector<16x32xbf16>
    %c0_23 = arith.constant 0 : index
    %c0_24 = arith.constant 0 : index
    %94 = vector.load %arg5[%c0_23, %c0_24] : memref<32x64xbf16, #tpu.memory_space<vmem>>, vector<32x64xbf16>
    %cst_25 = arith.constant dense<0.000000e+00> : vector<16x64xf32>
    %95 = tpu.matmul %93, %94, %cst_25 {dimension_numbers = #tpu.dot_dimension_numbers<[1], [0], [0], [1], [0, 0, 1, 1], [], []>} : vector<16x32xbf16>, vector<32x64xbf16>, vector<16x64xf32> -> vector<16x64xf32>
    %c0_26 = arith.constant 0 : index
    %c0_27 = arith.constant 0 : index
    %96 = vector.load %arg6[%c0_26, %c0_27] : memref<1x64xf32, #tpu.memory_space<vmem>>, vector<1x64xf32>
    %97 = vector.broadcast %96 : vector<1x64xf32> to vector<16x64xf32>
    %98 = arith.addf %95, %97 : vector<16x64xf32>
    %cst_28 = arith.constant 0.000000e+00 : f32
    %99 = vector.broadcast %cst_28 : f32 to vector<16x64xf32>
    %100 = arith.maximumf %98, %99 : vector<16x64xf32>
    %101 = arith.truncf %100 : vector<16x64xf32> to vector<16x64xbf16>
    %c0_29 = arith.constant 0 : index
    %c0_30 = arith.constant 0 : index
    %102 = vector.load %arg7[%c0_29, %c0_30] : memref<64x32xbf16, #tpu.memory_space<vmem>>, vector<64x32xbf16>
    %cst_31 = arith.constant dense<0.000000e+00> : vector<16x32xf32>
    %103 = tpu.matmul %101, %102, %cst_31 {dimension_numbers = #tpu.dot_dimension_numbers<[1], [0], [0], [1], [0, 0, 1, 1], [], []>} : vector<16x64xbf16>, vector<64x32xbf16>, vector<16x32xf32> -> vector<16x32xf32>
    %c0_32 = arith.constant 0 : index
    %c0_33 = arith.constant 0 : index
    %104 = vector.load %arg8[%c0_32, %c0_33] : memref<1x32xf32, #tpu.memory_space<vmem>>, vector<1x32xf32>
    %105 = vector.broadcast %104 : vector<1x32xf32> to vector<16x32xf32>
    %106 = arith.addf %103, %105 : vector<16x32xf32>
    %107 = arith.addf %92, %106 : vector<16x32xf32>
    %c0_34 = arith.constant 0 : index
    %c0_35 = arith.constant 0 : index
    %108 = vector.load %arg11[%c0_34, %c0_35] : memref<1x32xf32, #tpu.memory_space<vmem>>, vector<1x32xf32>
    %c0_36 = arith.constant 0 : index
    %c0_37 = arith.constant 0 : index
    %109 = vector.load %arg12[%c0_36, %c0_37] : memref<1x32xf32, #tpu.memory_space<vmem>>, vector<1x32xf32>
    %cst_38 = arith.constant dense<0.000000e+00> : vector<16xf32>
    %110 = vector.multi_reduction <add>, %107, %cst_38 [1] : vector<16x32xf32> to vector<16xf32>
    %111 = vector.shape_cast %110 : vector<16xf32> to vector<16x1xf32>
    %cst_39 = arith.constant 3.200000e+01 : f32
    %112 = vector.broadcast %cst_39 : f32 to vector<16x1xf32>
    %113 = arith.divf %111, %112 : vector<16x1xf32>
    %114 = arith.mulf %107, %107 : vector<16x32xf32>
    %cst_40 = arith.constant dense<0.000000e+00> : vector<16xf32>
    %115 = vector.multi_reduction <add>, %114, %cst_40 [1] : vector<16x32xf32> to vector<16xf32>
    %116 = vector.shape_cast %115 : vector<16xf32> to vector<16x1xf32>
    %cst_41 = arith.constant 3.200000e+01 : f32
    %117 = vector.broadcast %cst_41 : f32 to vector<16x1xf32>
    %118 = arith.divf %116, %117 : vector<16x1xf32>
    %119 = arith.mulf %113, %113 : vector<16x1xf32>
    %120 = arith.subf %118, %119 : vector<16x1xf32>
    %121 = vector.broadcast %113 : vector<16x1xf32> to vector<16x32xf32>
    %122 = arith.subf %107, %121 : vector<16x32xf32>
    %cst_42 = arith.constant 9.99999974E-6 : f32
    %123 = vector.broadcast %cst_42 : f32 to vector<16x1xf32>
    %124 = arith.addf %120, %123 : vector<16x1xf32>
    %125 = math.rsqrt %124 : vector<16x1xf32>
    %126 = vector.broadcast %125 : vector<16x1xf32> to vector<16x32xf32>
    %127 = arith.mulf %122, %126 : vector<16x32xf32>
    %128 = vector.broadcast %108 : vector<1x32xf32> to vector<16x32xf32>
    %129 = arith.mulf %127, %128 : vector<16x32xf32>
    %130 = vector.broadcast %109 : vector<1x32xf32> to vector<16x32xf32>
    %131 = arith.addf %129, %130 : vector<16x32xf32>
    %c0_43 = arith.constant 0 : index
    %c0_44 = arith.constant 0 : index
    %132 = vector.load %arg13[%c0_43, %c0_44] : memref<16x32xf32, #tpu.memory_space<vmem>>, vector<16x32xf32>
    tpu.vector_store %arg13[%c0_43, %c0_44], %131 {strides = array<i32>} : memref<16x32xf32, #tpu.memory_space<vmem>>, vector<16x32xf32>,
    return
  }
}

</mosaic_0001>

<llo_original>
// kernel: transformer_layer.1
$region0: #{transformer_layer.1}
  #allocation0 [shape = 'u32[]', space=smem, size = 0x4, offset = 0x4, fixed_abs, tag = 'smem constant byte address 0x4 - core index']
  #allocation1 [shape = 'u32[144,128]{1,0:T(1,128)}', space=vmem, size = 0x12000, scoped, tag = 'internal scratch']
  %s0 = inlined_call_operand.vmem [shape: f32[16,32], index: 0, kind: input, shape index: {}]
  %s1 = inlined_call_operand.vmem [shape: bf16[32,96], index: 1, kind: input, shape index: {}]
  %s2 = inlined_call_operand.vmem [shape: f32[1,96], index: 2, kind: input, shape index: {}]
  %s3 = inlined_call_operand.vmem [shape: bf16[32,32], index: 3, kind: input, shape index: {}]
  %s4 = inlined_call_operand.vmem [shape: f32[1,32], index: 4, kind: input, shape index: {}]
  %s5 = inlined_call_operand.hbm [shape: bf16[32,64], index: 5, kind: input, shape index: {}]
  %s6 = inlined_call_operand.vmem [shape: f32[1,64], index: 6, kind: input, shape index: {}]
  %s7 = inlined_call_operand.vmem [shape: bf16[64,32], index: 7, kind: input, shape index: {}]
  %s8 = inlined_call_operand.vmem [shape: f32[1,32], index: 8, kind: input, shape index: {}]
  %s9 = inlined_call_operand.vmem [shape: f32[1,32], index: 9, kind: input, shape index: {}]
  %s10 = inlined_call_operand.vmem [shape: f32[1,32], index: 10, kind: input, shape index: {}]
  %s11 = inlined_call_operand.vmem [shape: f32[1,32], index: 11, kind: input, shape index: {}]
  %s12 = inlined_call_operand.vmem [shape: f32[1,32], index: 12, kind: input, shape index: {}]
  %s13 = inlined_call_operand.hbm [shape: f32[16,32], index: 13, kind: output, shape index: {}]
  %s14 = sld [smem:[#allocation0]]
  $region66: #{transformer_layer.1} parent=0
    _
  %s16 = ssub.s32 1, %s14
  %s17 = scalar_select 0, %s16, %s14
  $region1: #{transformer_layer.1} parent=0
    #allocation2 [shape = 'u8[8192]{0}', space=vmem, size = 0x2000, scoped, tag = 'input window, operand 5, single buffered']
    #allocation3 [shape = 's32[1]{0}', space=sflag, size = 0x4, scoped, tag = 'scoped memory for transformer_layer.1']
    #allocation4 [shape = 's32[1]{0}', space=sflag, size = 0x4, scoped, tag = 'scoped memory for transformer_layer.1']
    #allocation5 [shape = 'u8[8192]{0}', space=vmem, size = 0x2000, scoped, tag = 'output window, operand 0, single buffered']
    %18 = vsyncpa [#allocation3], 0
    %19 = vsyncpa [#allocation4], 0
    // Predicated region
    $region2: #{transformer_layer.1} parent=1 // pred_check
      _
    $region3: #{transformer_layer.1} parent=1 // pred_check_branch
      %21 = sbr.rel (0) target = $region5
    $region4: #{transformer_layer.1} parent=1 // pred_region
      _
    $region5: #{transformer_layer.1} parent=1 // pred_fallthru
      _
    // Predicated region
    $region6: #{transformer_layer.1} parent=1 // pred_check
      _
    $region7: #{transformer_layer.1} parent=1 // pred_check_branch
      %23 = sbr.rel (0) target = $region9
    $region8: #{transformer_layer.1} parent=1 // pred_region
      _
    $region9: #{transformer_layer.1} parent=1 // pred_fallthru
      _
    // Predicated region
    $region10: #{transformer_layer.1} parent=1 // pred_check
      _
    $region11: #{transformer_layer.1} parent=1 // pred_check_branch
      %25 = sbr.rel (0) target = $region13
    $region12: #{transformer_layer.1} parent=1 // pred_region
      _
    $region13: #{transformer_layer.1} parent=1 // pred_fallthru
      _
    // Predicated region
    $region14: #{transformer_layer.1} parent=1 // pred_check
      _
    $region15: #{transformer_layer.1} parent=1 // pred_check_branch
      %27 = sbr.rel (0) target = $region17
    $region16: #{transformer_layer.1} parent=1 // pred_region
      _
    $region17: #{transformer_layer.1} parent=1 // pred_fallthru
      _
    // Predicated region
    $region18: #{transformer_layer.1} parent=1 // pred_check
      _
    $region19: #{transformer_layer.1} parent=1 // pred_check_branch
      %29 = sbr.rel (0) target = $region21
    $region20: #{transformer_layer.1} parent=1 // pred_region
      _
    $region21: #{transformer_layer.1} parent=1 // pred_fallthru
      _
    // Predicated region
    $region22: #{transformer_layer.1} parent=1 // pred_check
      _
    $region23: #{transformer_layer.1} parent=1 // pred_check_branch
      %31 = sbr.rel (0) target = $region25
    $region24: #{transformer_layer.1} parent=1 // pred_region
      %s33 = ssub.s32 256, 256
      %34 = vsyncadd [#allocation3], %s33
      %s35 = sshll.u32 [#allocation2], 4
      %s36 = int_to_ptr.vmem [resolvable:$true] %s35
      %41 = dma.hbm_to_vmem [thread:$0]  %s5, 256, %s36, [#allocation3], 64, 64, 4
    $region25: #{transformer_layer.1} parent=1 // pred_fallthru
      _
    // Predicated region
    $region26: #{transformer_layer.1} parent=1 // pred_check
      _
    $region27: #{transformer_layer.1} parent=1 // pred_check_branch
      %43 = sbr.rel (0) target = $region29
    $region28: #{transformer_layer.1} parent=1 // pred_region
      _
    $region29: #{transformer_layer.1} parent=1 // pred_fallthru
      _
    // Predicated region
    $region30: #{transformer_layer.1} parent=1 // pred_check
      _
    $region31: #{transformer_layer.1} parent=1 // pred_check_branch
      %45 = sbr.rel (0) target = $region33
    $region32: #{transformer_layer.1} parent=1 // pred_region
      _
    $region33: #{transformer_layer.1} parent=1 // pred_fallthru
      _
    // Predicated region
    $region34: #{transformer_layer.1} parent=1 // pred_check
      _
    $region35: #{transformer_layer.1} parent=1 // pred_check_branch
      %47 = sbr.rel (0) target = $region37
    $region36: #{transformer_layer.1} parent=1 // pred_region
      _
    $region37: #{transformer_layer.1} parent=1 // pred_fallthru
      _
    // Predicated region
    $region38: #{transformer_layer.1} parent=1 // pred_check
      _
    $region39: #{transformer_layer.1} parent=1 // pred_check_branch
      %49 = sbr.rel (0) target = $region41
    $region40: #{transformer_layer.1} parent=1 // pred_region
      _
    $region41: #{transformer_layer.1} parent=1 // pred_fallthru
      _
    // Predicated region
    $region42: #{transformer_layer.1} parent=1 // pred_check
      _
    $region43: #{transformer_layer.1} parent=1 // pred_check_branch
      %51 = sbr.rel (0) target = $region45
    $region44: #{transformer_layer.1} parent=1 // pred_region
      _
    $region45: #{transformer_layer.1} parent=1 // pred_fallthru
      _
    // Predicated region
    $region46: #{transformer_layer.1} parent=1 // pred_check
      _
    $region47: #{transformer_layer.1} parent=1 // pred_check_branch
      %53 = sbr.rel (0) target = $region49
    $region48: #{transformer_layer.1} parent=1 // pred_region
      _
    $region49: #{transformer_layer.1} parent=1 // pred_fallthru
      _
    // Predicated region
    $region50: #{transformer_layer.1} parent=1 // pred_check
      _
    $region51: #{transformer_layer.1} parent=1 // pred_check_branch
      %55 = sbr.rel (0) target = $region53
    $region52: #{transformer_layer.1} parent=1 // pred_region
      _
    $region53: #{transformer_layer.1} parent=1 // pred_fallthru
      _
    // Predicated region
    $region54: #{transformer_layer.1} parent=1 // pred_check
      _
    $region55: #{transformer_layer.1} parent=1 // pred_check_branch
      %57 = sbr.rel (0) target = $region57
    $region56: #{transformer_layer.1} parent=1 // pred_region
      %58 = dma.done [#allocation3], 256
    $region57: #{transformer_layer.1} parent=1 // pred_fallthru
      _
    %v60 = vld [vmem:[%s0] sm:$0xff]
    %v61 = vld [vmem:[%s0 + $0x8] sm:$0xff]
    %v62 = vpack.c.bf16 %v61, %v60
    %v63 = vld [vmem:[%s1] sm:$0xf]
    %v64 = vld [vmem:[%s1 + $0x4] sm:$0xf]
    %v65 = vld [vmem:[%s1 + $0x8] sm:$0xf]
    %v66 = vld [vmem:[%s1 + $0xc] sm:$0xf]
    %v67 = vld [vmem:[%s2] sm:$0x1]
    %v69 = vlaneseq
    %v70 = vshrl.u32 %v69, 7
    %v71 = vsub.s32 0, %v70
    %v72 = vrot.slane %v67, %v71
    %v78 = vunpack.c.l.b16 %v63
    %v79 = vunpack.c.l.b16 %v64
    %v80 = vunpack.c.l.b16 %v65
    %v81 = vunpack.c.l.b16 %v66
    %v82 = vpack.c.b16 %v79, %v78
    %v83 = vpack.c.b16 %v81, %v80
    %vm86 = vcmask 261120
    %v88 = vsel %vm86, %v62, 0
    %90 = vmatprep.subr.bf16.mxu0 0
    %91 = vmatpush1.bf16.msra.mxu0 %v82
    %92 = vmatprep.subr.bf16.mxu0 0
    %93 = vmatpush1.bf16.msra.mxu0 %v83
    %94 = vmatprep.subr.bf16.mxu0 0
    %95 = vmatpush1.bf16.msra.mxu0 0
    %96 = vmatprep.subr.bf16.mxu0 0
    %97 = vmatpush1.bf16.msra.mxu0 0
    %98 = vmatprep.subr.bf16.mxu0 0
    %99 = vmatpush1.bf16.msra.mxu0 0
    %100 = vmatprep.subr.bf16.mxu0 0
    %101 = vmatpush1.bf16.msra.mxu0 0
    %102 = vmatprep.subr.bf16.mxu0 0
    %103 = vmatpush1.bf16.msra.mxu0 0
    %104 = vmatprep.subr.bf16.mxu0 0
    %105 = vmatpush1.bf16.msra.mxu0 0
    %106 = vmatprep.subr.bf16.mxu0 0
    %107 = vmatpush1.bf16.msra.mxu0 0
    %108 = vmatprep.subr.bf16.mxu0 0
    %109 = vmatpush1.bf16.msra.mxu0 0
    %110 = vmatprep.subr.bf16.mxu0 0
    %111 = vmatpush1.bf16.msra.mxu0 0
    %112 = vmatprep.subr.bf16.mxu0 0
    %113 = vmatpush1.bf16.msra.mxu0 0
    %114 = vmatprep.subr.bf16.mxu0 0
    %115 = vmatpush1.bf16.msra.mxu0 0
    %116 = vmatprep.subr.bf16.mxu0 0
    %117 = vmatpush1.bf16.msra.mxu0 0
    %118 = vmatprep.subr.bf16.mxu0 0
    %119 = vmatpush1.bf16.msra.mxu0 0
    %120 = vmatprep.subr.bf16.mxu0 0
    %121 = vmatpush1.bf16.msra.mxu0 0
    %122 = vmatprep.mubr.bf16.mxu0 0
    %123 = vmatmul.mubr.bf16.gmra.mrb[0].mxu0 %v88
    %v124 = vpop.f32.mrb[0].mxu0
    %v125 = vadd.f32 %v72, %v124
    %v126 = vpop.f32.mrb[0].mxu0
    %v127 = vpop.f32.mrb[0].mxu0
    %v128 = vadd.f32 %v72, %v127
    %v129 = vpop.f32.mrb[0].mxu0
    %130 = vdwg.mxu0
    %133 = vrot.lane.b32.xlu0 %v125, 120
    %v134 = vpop.permute.xlu0 %133
    %135 = vrot.lane.b32.xlu0 %v128, 120
    %v136 = vpop.permute.xlu0 %135
    %139 = vrot.lane.b32.xlu0 %v125, 112
    %v140 = vpop.permute.xlu0 %139
    %141 = vrot.lane.b32.xlu0 %v128, 112
    %v142 = vpop.permute.xlu0 %141
    %145 = vrot.lane.b32.xlu0 %v125, 104
    %v146 = vpop.permute.xlu0 %145
    %147 = vrot.lane.b32.xlu0 %v128, 104
    %v148 = vpop.permute.xlu0 %147
    %v151 = vpack.c.bf16 %v125, %v125
    %v152 = vpack.c.bf16 %v128, %v128
    %v153 = vpack.c.bf16 %v134, %v134
    %v154 = vpack.c.bf16 %v136, %v136
    %v155 = vpack.c.bf16 %v140, %v140
    %v156 = vpack.c.bf16 %v142, %v142
    %v157 = vpack.c.bf16 %v146, %v146
    %v158 = vpack.c.bf16 %v148, %v148
    %160 = vrot.lane.b32.xlu0 %v151, 96
    %v161 = vpop.permute.xlu0 %160
    %vm162 = vcmask 64512
    %v164 = vsel %vm162, %v151, 0
    %v167 = vsel %vm162, %v161, 0
    %169 = vmatprep.subr.bf16.mxu0 0
    %170 = vmatpush1.bf16.xpose.msra.mxu0 %v167
    %171 = vmatprep.subr.bf16.mxu0 0
    %172 = vmatpush1.bf16.xpose.msra.mxu0 0
    %173 = vmatprep.subr.bf16.mxu0 0
    %174 = vmatpush1.bf16.xpose.msra.mxu0 0
    %175 = vmatprep.subr.bf16.mxu0 0
    %176 = vmatpush1.bf16.xpose.msra.mxu0 0
    %177 = vmatprep.subr.bf16.mxu0 0
    %178 = vmatpush1.bf16.xpose.msra.mxu0 0
    %179 = vmatprep.subr.bf16.mxu0 0
    %180 = vmatpush1.bf16.xpose.msra.mxu0 0
    %181 = vmatprep.subr.bf16.mxu0 0
    %182 = vmatpush1.bf16.xpose.msra.mxu0 0
    %183 = vmatprep.subr.bf16.mxu0 0
    %184 = vmatpush1.bf16.xpose.msra.mxu0 0
    %185 = vmatprep.subr.bf16.mxu0 0
    %186 = vmatpush1.bf16.xpose.msra.mxu0 0
    %187 = vmatprep.subr.bf16.mxu0 0
    %188 = vmatpush1.bf16.xpose.msra.mxu0 0
    %189 = vmatprep.subr.bf16.mxu0 0
    %190 = vmatpush1.bf16.xpose.msra.mxu0 0
    %191 = vmatprep.subr.bf16.mxu0 0
    %192 = vmatpush1.bf16.xpose.msra.mxu0 0
    %193 = vmatprep.subr.bf16.mxu0 0
    %194 = vmatpush1.bf16.xpose.msra.mxu0 0
    %195 = vmatprep.subr.bf16.mxu0 0
    %196 = vmatpush1.bf16.xpose.msra.mxu0 0
    %197 = vmatprep.subr.bf16.mxu0 0
    %198 = vmatpush1.bf16.xpose.msra.mxu0 0
    %199 = vmatprep.subr.bf16.mxu0 0
    %200 = vmatpush1.bf16.xpose.msra.mxu0 0
    %201 = vmatprep.mubr.bf16.mxu0 0
    %202 = vmatmul.mubr.bf16.gmra.mrb[0].mxu0 %v164
    %v203 = vpop.f32.mrb[0].mxu0
    %v204 = vadd.f32 0.0, %v203
    %v205 = vpop.f32.mrb[0].mxu0
    %v206 = vpop.f32.mrb[0].mxu0
    %v207 = vpop.f32.mrb[0].mxu0
    %208 = vdwg.mxu0
    %210 = vrot.lane.b32.xlu0 %v152, 96
    %v211 = vpop.permute.xlu0 %210
    %v213 = vsel %vm162, %v152, 0
    %v216 = vsel %vm162, %v211, 0
    %218 = vmatprep.subr.bf16.mxu0 0
    %219 = vmatpush1.bf16.xpose.msra.mxu0 %v216
    %220 = vmatprep.subr.bf16.mxu0 0
    %221 = vmatpush1.bf16.xpose.msra.mxu0 0
    %222 = vmatprep.subr.bf16.mxu0 0
    %223 = vmatpush1.bf16.xpose.msra.mxu0 0
    %224 = vmatprep.subr.bf16.mxu0 0
    %225 = vmatpush1.bf16.xpose.msra.mxu0 0
    %226 = vmatprep.subr.bf16.mxu0 0
    %227 = vmatpush1.bf16.xpose.msra.mxu0 0
    %228 = vmatprep.subr.bf16.mxu0 0
    %229 = vmatpush1.bf16.xpose.msra.mxu0 0
    %230 = vmatprep.subr.bf16.mxu0 0
    %231 = vmatpush1.bf16.xpose.msra.mxu0 0
    %232 = vmatprep.subr.bf16.mxu0 0
    %233 = vmatpush1.bf16.xpose.msra.mxu0 0
    %234 = vmatprep.subr.bf16.mxu0 0
    %235 = vmatpush1.bf16.xpose.msra.mxu0 0
    %236 = vmatprep.subr.bf16.mxu0 0
    %237 = vmatpush1.bf16.xpose.msra.mxu0 0
    %238 = vmatprep.subr.bf16.mxu0 0
    %239 = vmatpush1.bf16.xpose.msra.mxu0 0
    %240 = vmatprep.subr.bf16.mxu0 0
    %241 = vmatpush1.bf16.xpose.msra.mxu0 0
    %242 = vmatprep.subr.bf16.mxu0 0
    %243 = vmatpush1.bf16.xpose.msra.mxu0 0
    %244 = vmatprep.subr.bf16.mxu0 0
    %245 = vmatpush1.bf16.xpose.msra.mxu0 0
    %246 = vmatprep.subr.bf16.mxu0 0
    %247 = vmatpush1.bf16.xpose.msra.mxu0 0
    %248 = vmatprep.subr.bf16.mxu0 0
    %249 = vmatpush1.bf16.xpose.msra.mxu0 0
    %250 = vmatprep.mubr.bf16.mxu0 0
    %251 = vmatmul.mubr.bf16.gmra.mrb[0].mxu0 %v213
    %v252 = vpop.f32.mrb[0].mxu0
    %v253 = vadd.f32 0.0, %v252
    %v254 = vpop.f32.mrb[0].mxu0
    %v255 = vpop.f32.mrb[0].mxu0
    %v256 = vpop.f32.mrb[0].mxu0
    %257 = vdwg.mxu0
    %259 = vrot.lane.b32.xlu0 %v153, 96
    %v260 = vpop.permute.xlu0 %259
    %v262 = vsel %vm162, %v153, 0
    %v265 = vsel %vm162, %v260, 0
    %267 = vmatprep.subr.bf16.mxu0 0
    %268 = vmatpush1.bf16.xpose.msra.mxu0 %v265
    %269 = vmatprep.subr.bf16.mxu0 0
    %270 = vmatpush1.bf16.xpose.msra.mxu0 0
    %271 = vmatprep.subr.bf16.mxu0 0
    %272 = vmatpush1.bf16.xpose.msra.mxu0 0
    %273 = vmatprep.subr.bf16.mxu0 0
    %274 = vmatpush1.bf16.xpose.msra.mxu0 0
    %275 = vmatprep.subr.bf16.mxu0 0
    %276 = vmatpush1.bf16.xpose.msra.mxu0 0
    %277 = vmatprep.subr.bf16.mxu0 0
    %278 = vmatpush1.bf16.xpose.msra.mxu0 0
    %279 = vmatprep.subr.bf16.mxu0 0
    %280 = vmatpush1.bf16.xpose.msra.mxu0 0
    %281 = vmatprep.subr.bf16.mxu0 0
    %282 = vmatpush1.bf16.xpose.msra.mxu0 0
    %283 = vmatprep.subr.bf16.mxu0 0
    %284 = vmatpush1.bf16.xpose.msra.mxu0 0
    %285 = vmatprep.subr.bf16.mxu0 0
    %286 = vmatpush1.bf16.xpose.msra.mxu0 0
    %287 = vmatprep.subr.bf16.mxu0 0
    %288 = vmatpush1.bf16.xpose.msra.mxu0 0
    %289 = vmatprep.subr.bf16.mxu0 0
    %290 = vmatpush1.bf16.xpose.msra.mxu0 0
    %291 = vmatprep.subr.bf16.mxu0 0
    %292 = vmatpush1.bf16.xpose.msra.mxu0 0
    %293 = vmatprep.subr.bf16.mxu0 0
    %294 = vmatpush1.bf16.xpose.msra.mxu0 0
    %295 = vmatprep.subr.bf16.mxu0 0
    %296 = vmatpush1.bf16.xpose.msra.mxu0 0
    %297 = vmatprep.subr.bf16.mxu0 0
    %298 = vmatpush1.bf16.xpose.msra.mxu0 0
    %299 = vmatprep.mubr.bf16.mxu0 0
    %300 = vmatmul.mubr.bf16.gmra.mrb[0].mxu0 %v262
    %v301 = vpop.f32.mrb[0].mxu0
    %v302 = vadd.f32 0.0, %v301
    %v303 = vpop.f32.mrb[0].mxu0
    %v304 = vpop.f32.mrb[0].mxu0
    %v305 = vpop.f32.mrb[0].mxu0
    %306 = vdwg.mxu0
    %308 = vrot.lane.b32.xlu0 %v154, 96
    %v309 = vpop.permute.xlu0 %308
    %v311 = vsel %vm162, %v154, 0
    %v314 = vsel %vm162, %v309, 0
    %316 = vmatprep.subr.bf16.mxu0 0
    %317 = vmatpush1.bf16.xpose.msra.mxu0 %v314
    %318 = vmatprep.subr.bf16.mxu0 0
    %319 = vmatpush1.bf16.xpose.msra.mxu0 0
    %320 = vmatprep.subr.bf16.mxu0 0
    %321 = vmatpush1.bf16.xpose.msra.mxu0 0
    %322 = vmatprep.subr.bf16.mxu0 0
    %323 = vmatpush1.bf16.xpose.msra.mxu0 0
    %324 = vmatprep.subr.bf16.mxu0 0
    %325 = vmatpush1.bf16.xpose.msra.mxu0 0
    %326 = vmatprep.subr.bf16.mxu0 0
    %327 = vmatpush1.bf16.xpose.msra.mxu0 0
    %328 = vmatprep.subr.bf16.mxu0 0
    %329 = vmatpush1.bf16.xpose.msra.mxu0 0
    %330 = vmatprep.subr.bf16.mxu0 0
    %331 = vmatpush1.bf16.xpose.msra.mxu0 0
    %332 = vmatprep.subr.bf16.mxu0 0
    %333 = vmatpush1.bf16.xpose.msra.mxu0 0
    %334 = vmatprep.subr.bf16.mxu0 0
    %335 = vmatpush1.bf16.xpose.msra.mxu0 0
    %336 = vmatprep.subr.bf16.mxu0 0
    %337 = vmatpush1.bf16.xpose.msra.mxu0 0
    %338 = vmatprep.subr.bf16.mxu0 0
    %339 = vmatpush1.bf16.xpose.msra.mxu0 0
    %340 = vmatprep.subr.bf16.mxu0 0
    %341 = vmatpush1.bf16.xpose.msra.mxu0 0
    %342 = vmatprep.subr.bf16.mxu0 0
    %343 = vmatpush1.bf16.xpose.msra.mxu0 0
    %344 = vmatprep.subr.bf16.mxu0 0
    %345 = vmatpush1.bf16.xpose.msra.mxu0 0
    %346 = vmatprep.subr.bf16.mxu0 0
    %347 = vmatpush1.bf16.xpose.msra.mxu0 0
    %348 = vmatprep.mubr.bf16.mxu0 0
    %349 = vmatmul.mubr.bf16.gmra.mrb[0].mxu0 %v311
    %v350 = vpop.f32.mrb[0].mxu0
    %v351 = vadd.f32 0.0, %v350
    %v352 = vpop.f32.mrb[0].mxu0
    %v353 = vpop.f32.mrb[0].mxu0
    %v354 = vpop.f32.mrb[0].mxu0
    %355 = vdwg.mxu0
    %357 = vrot.lane.b32.xlu0 %v155, 96
    %v358 = vpop.permute.xlu0 %357
    %v360 = vsel %vm162, %v155, 0
    %v363 = vsel %vm162, %v358, 0
    %365 = vmatprep.subr.bf16.mxu0 0
    %366 = vmatpush1.bf16.xpose.msra.mxu0 %v363
    %367 = vmatprep.subr.bf16.mxu0 0
    %368 = vmatpush1.bf16.xpose.msra.mxu0 0
    %369 = vmatprep.subr.bf16.mxu0 0
    %370 = vmatpush1.bf16.xpose.msra.mxu0 0
    %371 = vmatprep.subr.bf16.mxu0 0
    %372 = vmatpush1.bf16.xpose.msra.mxu0 0
    %373 = vmatprep.subr.bf16.mxu0 0
    %374 = vmatpush1.bf16.xpose.msra.mxu0 0
    %375 = vmatprep.subr.bf16.mxu0 0
    %376 = vmatpush1.bf16.xpose.msra.mxu0 0
    %377 = vmatprep.subr.bf16.mxu0 0
    %378 = vmatpush1.bf16.xpose.msra.mxu0 0
    %379 = vmatprep.subr.bf16.mxu0 0
    %380 = vmatpush1.bf16.xpose.msra.mxu0 0
    %381 = vmatprep.subr.bf16.mxu0 0
    %382 = vmatpush1.bf16.xpose.msra.mxu0 0
    %383 = vmatprep.subr.bf16.mxu0 0
    %384 = vmatpush1.bf16.xpose.msra.mxu0 0
    %385 = vmatprep.subr.bf16.mxu0 0
    %386 = vmatpush1.bf16.xpose.msra.mxu0 0
    %387 = vmatprep.subr.bf16.mxu0 0
    %388 = vmatpush1.bf16.xpose.msra.mxu0 0
    %389 = vmatprep.subr.bf16.mxu0 0
    %390 = vmatpush1.bf16.xpose.msra.mxu0 0
    %391 = vmatprep.subr.bf16.mxu0 0
    %392 = vmatpush1.bf16.xpose.msra.mxu0 0
    %393 = vmatprep.subr.bf16.mxu0 0
    %394 = vmatpush1.bf16.xpose.msra.mxu0 0
    %395 = vmatprep.subr.bf16.mxu0 0
    %396 = vmatpush1.bf16.xpose.msra.mxu0 0
    %397 = vmatprep.mubr.bf16.mxu0 0
    %398 = vmatmul.mubr.bf16.gmra.mrb[0].mxu0 %v360
    %v399 = vpop.f32.mrb[0].mxu0
    %v400 = vadd.f32 0.0, %v399
    %v401 = vpop.f32.mrb[0].mxu0
    %v402 = vpop.f32.mrb[0].mxu0
    %v403 = vpop.f32.mrb[0].mxu0
    %404 = vdwg.mxu0
    %406 = vrot.lane.b32.xlu0 %v156, 96
    %v407 = vpop.permute.xlu0 %406
    %v409 = vsel %vm162, %v156, 0
    %v412 = vsel %vm162, %v407, 0
    %414 = vmatprep.subr.bf16.mxu0 0
    %415 = vmatpush1.bf16.xpose.msra.mxu0 %v412
    %416 = vmatprep.subr.bf16.mxu0 0
    %417 = vmatpush1.bf16.xpose.msra.mxu0 0
    %418 = vmatprep.subr.bf16.mxu0 0
    %419 = vmatpush1.bf16.xpose.msra.mxu0 0
    %420 = vmatprep.subr.bf16.mxu0 0
    %421 = vmatpush1.bf16.xpose.msra.mxu0 0
    %422 = vmatprep.subr.bf16.mxu0 0
    %423 = vmatpush1.bf16.xpose.msra.mxu0 0
    %424 = vmatprep.subr.bf16.mxu0 0
    %425 = vmatpush1.bf16.xpose.msra.mxu0 0
    %426 = vmatprep.subr.bf16.mxu0 0
    %427 = vmatpush1.bf16.xpose.msra.mxu0 0
    %428 = vmatprep.subr.bf16.mxu0 0
    %429 = vmatpush1.bf16.xpose.msra.mxu0 0
    %430 = vmatprep.subr.bf16.mxu0 0
    %431 = vmatpush1.bf16.xpose.msra.mxu0 0
    %432 = vmatprep.subr.bf16.mxu0 0
    %433 = vmatpush1.bf16.xpose.msra.mxu0 0
    %434 = vmatprep.subr.bf16.mxu0 0
    %435 = vmatpush1.bf16.xpose.msra.mxu0 0
    %436 = vmatprep.subr.bf16.mxu0 0
    %437 = vmatpush1.bf16.xpose.msra.mxu0 0
    %438 = vmatprep.subr.bf16.mxu0 0
    %439 = vmatpush1.bf16.xpose.msra.mxu0 0
    %440 = vmatprep.subr.bf16.mxu0 0
    %441 = vmatpush1.bf16.xpose.msra.mxu0 0
    %442 = vmatprep.subr.bf16.mxu0 0
    %443 = vmatpush1.bf16.xpose.msra.mxu0 0
    %444 = vmatprep.subr.bf16.mxu0 0
    %445 = vmatpush1.bf16.xpose.msra.mxu0 0
    %446 = vmatprep.mubr.bf16.mxu0 0
    %447 = vmatmul.mubr.bf16.gmra.mrb[0].mxu0 %v409
    %v448 = vpop.f32.mrb[0].mxu0
    %v449 = vadd.f32 0.0, %v448
    %v450 = vpop.f32.mrb[0].mxu0
    %v451 = vpop.f32.mrb[0].mxu0
    %v452 = vpop.f32.mrb[0].mxu0
    %453 = vdwg.mxu0
    %455 = vrot.lane.b32.xlu0 %v157, 96
    %v456 = vpop.permute.xlu0 %455
    %v458 = vsel %vm162, %v157, 0
    %v461 = vsel %vm162, %v456, 0
    %463 = vmatprep.subr.bf16.mxu0 0
    %464 = vmatpush1.bf16.xpose.msra.mxu0 %v461
    %465 = vmatprep.subr.bf16.mxu0 0
    %466 = vmatpush1.bf16.xpose.msra.mxu0 0
    %467 = vmatprep.subr.bf16.mxu0 0
    %468 = vmatpush1.bf16.xpose.msra.mxu0 0
    %469 = vmatprep.subr.bf16.mxu0 0
    %470 = vmatpush1.bf16.xpose.msra.mxu0 0
    %471 = vmatprep.subr.bf16.mxu0 0
    %472 = vmatpush1.bf16.xpose.msra.mxu0 0
    %473 = vmatprep.subr.bf16.mxu0 0
    %474 = vmatpush1.bf16.xpose.msra.mxu0 0
    %475 = vmatprep.subr.bf16.mxu0 0
    %476 = vmatpush1.bf16.xpose.msra.mxu0 0
    %477 = vmatprep.subr.bf16.mxu0 0
    %478 = vmatpush1.bf16.xpose.msra.mxu0 0
    %479 = vmatprep.subr.bf16.mxu0 0
    %480 = vmatpush1.bf16.xpose.msra.mxu0 0
    %481 = vmatprep.subr.bf16.mxu0 0
    %482 = vmatpush1.bf16.xpose.msra.mxu0 0
    %483 = vmatprep.subr.bf16.mxu0 0
    %484 = vmatpush1.bf16.xpose.msra.mxu0 0
    %485 = vmatprep.subr.bf16.mxu0 0
    %486 = vmatpush1.bf16.xpose.msra.mxu0 0
    %487 = vmatprep.subr.bf16.mxu0 0
    %488 = vmatpush1.bf16.xpose.msra.mxu0 0
    %489 = vmatprep.subr.bf16.mxu0 0
    %490 = vmatpush1.bf16.xpose.msra.mxu0 0
    %491 = vmatprep.subr.bf16.mxu0 0
    %492 = vmatpush1.bf16.xpose.msra.mxu0 0
    %493 = vmatprep.subr.bf16.mxu0 0
    %494 = vmatpush1.bf16.xpose.msra.mxu0 0
    %495 = vmatprep.mubr.bf16.mxu0 0
    %496 = vmatmul.mubr.bf16.gmra.mrb[0].mxu0 %v458
    %v497 = vpop.f32.mrb[0].mxu0
    %v498 = vadd.f32 0.0, %v497
    %v499 = vpop.f32.mrb[0].mxu0
    %v500 = vpop.f32.mrb[0].mxu0
    %v501 = vpop.f32.mrb[0].mxu0
    %502 = vdwg.mxu0
    %504 = vrot.lane.b32.xlu0 %v158, 96
    %v505 = vpop.permute.xlu0 %504
    %v507 = vsel %vm162, %v158, 0
    %v510 = vsel %vm162, %v505, 0
    %512 = vmatprep.subr.bf16.mxu0 0
    %513 = vmatpush1.bf16.xpose.msra.mxu0 %v510
    %514 = vmatprep.subr.bf16.mxu0 0
    %515 = vmatpush1.bf16.xpose.msra.mxu0 0
    %516 = vmatprep.subr.bf16.mxu0 0
    %517 = vmatpush1.bf16.xpose.msra.mxu0 0
    %518 = vmatprep.subr.bf16.mxu0 0
    %519 = vmatpush1.bf16.xpose.msra.mxu0 0
    %520 = vmatprep.subr.bf16.mxu0 0
    %521 = vmatpush1.bf16.xpose.msra.mxu0 0
    %522 = vmatprep.subr.bf16.mxu0 0
    %523 = vmatpush1.bf16.xpose.msra.mxu0 0
    %524 = vmatprep.subr.bf16.mxu0 0
    %525 = vmatpush1.bf16.xpose.msra.mxu0 0
    %526 = vmatprep.subr.bf16.mxu0 0
    %527 = vmatpush1.bf16.xpose.msra.mxu0 0
    %528 = vmatprep.subr.bf16.mxu0 0
    %529 = vmatpush1.bf16.xpose.msra.mxu0 0
    %530 = vmatprep.subr.bf16.mxu0 0
    %531 = vmatpush1.bf16.xpose.msra.mxu0 0
    %532 = vmatprep.subr.bf16.mxu0 0
    %533 = vmatpush1.bf16.xpose.msra.mxu0 0
    %534 = vmatprep.subr.bf16.mxu0 0
    %535 = vmatpush1.bf16.xpose.msra.mxu0 0
    %536 = vmatprep.subr.bf16.mxu0 0
    %537 = vmatpush1.bf16.xpose.msra.mxu0 0
    %538 = vmatprep.subr.bf16.mxu0 0
    %539 = vmatpush1.bf16.xpose.msra.mxu0 0
    %540 = vmatprep.subr.bf16.mxu0 0
    %541 = vmatpush1.bf16.xpose.msra.mxu0 0
    %542 = vmatprep.subr.bf16.mxu0 0
    %543 = vmatpush1.bf16.xpose.msra.mxu0 0
    %544 = vmatprep.mubr.bf16.mxu0 0
    %545 = vmatmul.mubr.bf16.gmra.mrb[0].mxu0 %v507
    %v546 = vpop.f32.mrb[0].mxu0
    %v547 = vadd.f32 0.0, %v546
    %v548 = vpop.f32.mrb[0].mxu0
    %v549 = vpop.f32.mrb[0].mxu0
    %v550 = vpop.f32.mrb[0].mxu0
    %551 = vdwg.mxu0
    %v552 = vsel %vm162, %v204, -inf
    %553 = vmax.xlane.f32.xlu0 %v552
    %v554 = vpop.xlane.xlu0 %553
    %v555 = vsel %vm162, %v253, -inf
    %556 = vmax.xlane.f32.xlu0 %v555
    %v557 = vpop.xlane.xlu0 %556
    %v558 = vsel %vm162, %v302, -inf
    %559 = vmax.xlane.f32.xlu0 %v558
    %v560 = vpop.xlane.xlu0 %559
    %v561 = vsel %vm162, %v351, -inf
    %562 = vmax.xlane.f32.xlu0 %v561
    %v563 = vpop.xlane.xlu0 %562
    %v564 = vsel %vm162, %v400, -inf
    %565 = vmax.xlane.f32.xlu0 %v564
    %v566 = vpop.xlane.xlu0 %565
    %v567 = vsel %vm162, %v449, -inf
    %568 = vmax.xlane.f32.xlu0 %v567
    %v569 = vpop.xlane.xlu0 %568
    %v570 = vsel %vm162, %v498, -inf
    %571 = vmax.xlane.f32.xlu0 %v570
    %v572 = vpop.xlane.xlu0 %571
    %v573 = vsel %vm162, %v547, -inf
    %574 = vmax.xlane.f32.xlu0 %v573
    %v575 = vpop.xlane.xlu0 %574
    %v576 = vsub.f32 %v204, %v554
    %v577 = vsub.f32 %v253, %v557
    %v578 = vsub.f32 %v302, %v560
    %v579 = vsub.f32 %v351, %v563
    %v580 = vsub.f32 %v400, %v566
    %v581 = vsub.f32 %v449, %v569
    %v582 = vsub.f32 %v498, %v572
    %v583 = vsub.f32 %v547, %v575
    %v584 = vmul.f32 %v576, 1.442695
    %v585 = vpow.pop %v584
    %v586 = vmul.f32 %v577, 1.442695
    %v587 = vpow.pop %v586
    %v588 = vmul.f32 %v578, 1.442695
    %v589 = vpow.pop %v588
    %v590 = vmul.f32 %v579, 1.442695
    %v591 = vpow.pop %v590
    %v592 = vmul.f32 %v580, 1.442695
    %v593 = vpow.pop %v592
    %v594 = vmul.f32 %v581, 1.442695
    %v595 = vpow.pop %v594
    %v596 = vmul.f32 %v582, 1.442695
    %v597 = vpow.pop %v596
    %v598 = vmul.f32 %v583, 1.442695
    %v599 = vpow.pop %v598
    %v600 = vsel %vm162, %v585, 0.0
    %601 = vadd.xlane.f32.xlu0 %v600
    %v602 = vpop.xlane.xlu0 %601
    %v603 = vsel %vm162, %v587, 0.0
    %604 = vadd.xlane.f32.xlu0 %v603
    %v605 = vpop.xlane.xlu0 %604
    %v606 = vsel %vm162, %v589, 0.0
    %607 = vadd.xlane.f32.xlu0 %v606
    %v608 = vpop.xlane.xlu0 %607
    %v609 = vsel %vm162, %v591, 0.0
    %610 = vadd.xlane.f32.xlu0 %v609
    %v611 = vpop.xlane.xlu0 %610
    %v612 = vsel %vm162, %v593, 0.0
    %613 = vadd.xlane.f32.xlu0 %v612
    %v614 = vpop.xlane.xlu0 %613
    %v615 = vsel %vm162, %v595, 0.0
    %616 = vadd.xlane.f32.xlu0 %v615
    %v617 = vpop.xlane.xlu0 %616
    %v618 = vsel %vm162, %v597, 0.0
    %619 = vadd.xlane.f32.xlu0 %v618
    %v620 = vpop.xlane.xlu0 %619
    %v621 = vsel %vm162, %v599, 0.0
    %622 = vadd.xlane.f32.xlu0 %v621
    %v623 = vpop.xlane.xlu0 %622
    %v624 = vrcp.pop %v602
    %v625 = vrcp.pop %v605
    %v626 = vrcp.pop %v608
    %v627 = vrcp.pop %v611
    %v628 = vrcp.pop %v614
    %v629 = vrcp.pop %v617
    %v630 = vrcp.pop %v620
    %v631 = vrcp.pop %v623
    %v632 = vmul.f32 %v585, %v624
    %v633 = vmul.f32 %v587, %v625
    %v634 = vmul.f32 %v589, %v626
    %v635 = vmul.f32 %v591, %v627
    %v636 = vmul.f32 %v593, %v628
    %v637 = vmul.f32 %v595, %v629
    %v638 = vmul.f32 %v597, %v630
    %v639 = vmul.f32 %v599, %v631
    %v640 = vpack.c.bf16 %v632, %v632
    %v641 = vpack.c.bf16 %v633, %v633
    %v642 = vpack.c.bf16 %v634, %v634
    %v643 = vpack.c.bf16 %v635, %v635
    %v644 = vpack.c.bf16 %v636, %v636
    %v645 = vpack.c.bf16 %v637, %v637
    %v646 = vpack.c.bf16 %v638, %v638
    %v647 = vpack.c.bf16 %v639, %v639
    %648 = vrot.lane.b32.xlu0 %v151, 64
    %v649 = vpop.permute.xlu0 %648
    %v651 = vsel %vm162, %v640, 0
    %vm653 = vcmask 1043456
    %v655 = vsel %vm653, %v649, 0
    %657 = vmatprep.subr.bf16.mxu0 0
    %658 = vmatpush1.bf16.msra.mxu0 %v655
    %659 = vmatprep.subr.bf16.mxu0 0
    %660 = vmatpush1.bf16.msra.mxu0 0
    %661 = vmatprep.subr.bf16.mxu0 0
    %662 = vmatpush1.bf16.msra.mxu0 0
    %663 = vmatprep.subr.bf16.mxu0 0
    %664 = vmatpush1.bf16.msra.mxu0 0
    %665 = vmatprep.subr.bf16.mxu0 0
    %666 = vmatpush1.bf16.msra.mxu0 0
    %667 = vmatprep.subr.bf16.mxu0 0
    %668 = vmatpush1.bf16.msra.mxu0 0
    %669 = vmatprep.subr.bf16.mxu0 0
    %670 = vmatpush1.bf16.msra.mxu0 0
    %671 = vmatprep.subr.bf16.mxu0 0
    %672 = vmatpush1.bf16.msra.mxu0 0
    %673 = vmatprep.subr.bf16.mxu0 0
    %674 = vmatpush1.bf16.msra.mxu0 0
    %675 = vmatprep.subr.bf16.mxu0 0
    %676 = vmatpush1.bf16.msra.mxu0 0
    %677 = vmatprep.subr.bf16.mxu0 0
    %678 = vmatpush1.bf16.msra.mxu0 0
    %679 = vmatprep.subr.bf16.mxu0 0
    %680 = vmatpush1.bf16.msra.mxu0 0
    %681 = vmatprep.subr.bf16.mxu0 0
    %682 = vmatpush1.bf16.msra.mxu0 0
    %683 = vmatprep.subr.bf16.mxu0 0
    %684 = vmatpush1.bf16.msra.mxu0 0
    %685 = vmatprep.subr.bf16.mxu0 0
    %686 = vmatpush1.bf16.msra.mxu0 0
    %687 = vmatprep.subr.bf16.mxu0 0
    %688 = vmatpush1.bf16.msra.mxu0 0
    %689 = vmatprep.mubr.bf16.mxu0 0
    %690 = vmatmul.mubr.bf16.gmra.mrb[0].mxu0 %v651
    %v691 = vpop.f32.mrb[0].mxu0
    %v692 = vadd.f32 0.0, %v691
    %v693 = vpop.f32.mrb[0].mxu0
    %v694 = vpop.f32.mrb[0].mxu0
    %v695 = vpop.f32.mrb[0].mxu0
    %696 = vdwg.mxu0
    %697 = vrot.lane.b32.xlu0 %v152, 64
    %v698 = vpop.permute.xlu0 %697
    %v700 = vsel %vm162, %v641, 0
    %v703 = vsel %vm653, %v698, 0
    %705 = vmatprep.subr.bf16.mxu0 0
    %706 = vmatpush1.bf16.msra.mxu0 %v703
    %707 = vmatprep.subr.bf16.mxu0 0
    %708 = vmatpush1.bf16.msra.mxu0 0
    %709 = vmatprep.subr.bf16.mxu0 0
    %710 = vmatpush1.bf16.msra.mxu0 0
    %711 = vmatprep.subr.bf16.mxu0 0
    %712 = vmatpush1.bf16.msra.mxu0 0
    %713 = vmatprep.subr.bf16.mxu0 0
    %714 = vmatpush1.bf16.msra.mxu0 0
    %715 = vmatprep.subr.bf16.mxu0 0
    %716 = vmatpush1.bf16.msra.mxu0 0
    %717 = vmatprep.subr.bf16.mxu0 0
    %718 = vmatpush1.bf16.msra.mxu0 0
    %719 = vmatprep.subr.bf16.mxu0 0
    %720 = vmatpush1.bf16.msra.mxu0 0
    %721 = vmatprep.subr.bf16.mxu0 0
    %722 = vmatpush1.bf16.msra.mxu0 0
    %723 = vmatprep.subr.bf16.mxu0 0
    %724 = vmatpush1.bf16.msra.mxu0 0
    %725 = vmatprep.subr.bf16.mxu0 0
    %726 = vmatpush1.bf16.msra.mxu0 0
    %727 = vmatprep.subr.bf16.mxu0 0
    %728 = vmatpush1.bf16.msra.mxu0 0
    %729 = vmatprep.subr.bf16.mxu0 0
    %730 = vmatpush1.bf16.msra.mxu0 0
    %731 = vmatprep.subr.bf16.mxu0 0
    %732 = vmatpush1.bf16.msra.mxu0 0
    %733 = vmatprep.subr.bf16.mxu0 0
    %734 = vmatpush1.bf16.msra.mxu0 0
    %735 = vmatprep.subr.bf16.mxu0 0
    %736 = vmatpush1.bf16.msra.mxu0 0
    %737 = vmatprep.mubr.bf16.mxu0 0
    %738 = vmatmul.mubr.bf16.gmra.mrb[0].mxu0 %v700
    %v739 = vpop.f32.mrb[0].mxu0
    %v740 = vadd.f32 0.0, %v739
    %v741 = vpop.f32.mrb[0].mxu0
    %v742 = vpop.f32.mrb[0].mxu0
    %v743 = vpop.f32.mrb[0].mxu0
    %744 = vdwg.mxu0
    %745 = vrot.lane.b32.xlu0 %v153, 64
    %v746 = vpop.permute.xlu0 %745
    %v748 = vsel %vm162, %v642, 0
    %v751 = vsel %vm653, %v746, 0
    %753 = vmatprep.subr.bf16.mxu0 0
    %754 = vmatpush1.bf16.msra.mxu0 %v751
    %755 = vmatprep.subr.bf16.mxu0 0
    %756 = vmatpush1.bf16.msra.mxu0 0
    %757 = vmatprep.subr.bf16.mxu0 0
    %758 = vmatpush1.bf16.msra.mxu0 0
    %759 = vmatprep.subr.bf16.mxu0 0
    %760 = vmatpush1.bf16.msra.mxu0 0
    %761 = vmatprep.subr.bf16.mxu0 0
    %762 = vmatpush1.bf16.msra.mxu0 0
    %763 = vmatprep.subr.bf16.mxu0 0
    %764 = vmatpush1.bf16.msra.mxu0 0
    %765 = vmatprep.subr.bf16.mxu0 0
    %766 = vmatpush1.bf16.msra.mxu0 0
    %767 = vmatprep.subr.bf16.mxu0 0
    %768 = vmatpush1.bf16.msra.mxu0 0
    %769 = vmatprep.subr.bf16.mxu0 0
    %770 = vmatpush1.bf16.msra.mxu0 0
    %771 = vmatprep.subr.bf16.mxu0 0
    %772 = vmatpush1.bf16.msra.mxu0 0
    %773 = vmatprep.subr.bf16.mxu0 0
    %774 = vmatpush1.bf16.msra.mxu0 0
    %775 = vmatprep.subr.bf16.mxu0 0
    %776 = vmatpush1.bf16.msra.mxu0 0
    %777 = vmatprep.subr.bf16.mxu0 0
    %778 = vmatpush1.bf16.msra.mxu0 0
    %779 = vmatprep.subr.bf16.mxu0 0
    %780 = vmatpush1.bf16.msra.mxu0 0
    %781 = vmatprep.subr.bf16.mxu0 0
    %782 = vmatpush1.bf16.msra.mxu0 0
    %783 = vmatprep.subr.bf16.mxu0 0
    %784 = vmatpush1.bf16.msra.mxu0 0
    %785 = vmatprep.mubr.bf16.mxu0 0
    %786 = vmatmul.mubr.bf16.gmra.mrb[0].mxu0 %v748
    %v787 = vpop.f32.mrb[0].mxu0
    %v788 = vadd.f32 0.0, %v787
    %v789 = vpop.f32.mrb[0].mxu0
    %v790 = vpop.f32.mrb[0].mxu0
    %v791 = vpop.f32.mrb[0].mxu0
    %792 = vdwg.mxu0
    %793 = vrot.lane.b32.xlu0 %v154, 64
    %v794 = vpop.permute.xlu0 %793
    %v796 = vsel %vm162, %v643, 0
    %v799 = vsel %vm653, %v794, 0
    %801 = vmatprep.subr.bf16.mxu0 0
    %802 = vmatpush1.bf16.msra.mxu0 %v799
    %803 = vmatprep.subr.bf16.mxu0 0
    %804 = vmatpush1.bf16.msra.mxu0 0
    %805 = vmatprep.subr.bf16.mxu0 0
    %806 = vmatpush1.bf16.msra.mxu0 0
    %807 = vmatprep.subr.bf16.mxu0 0
    %808 = vmatpush1.bf16.msra.mxu0 0
    %809 = vmatprep.subr.bf16.mxu0 0
    %810 = vmatpush1.bf16.msra.mxu0 0
    %811 = vmatprep.subr.bf16.mxu0 0
    %812 = vmatpush1.bf16.msra.mxu0 0
    %813 = vmatprep.subr.bf16.mxu0 0
    %814 = vmatpush1.bf16.msra.mxu0 0
    %815 = vmatprep.subr.bf16.mxu0 0
    %816 = vmatpush1.bf16.msra.mxu0 0
    %817 = vmatprep.subr.bf16.mxu0 0
    %818 = vmatpush1.bf16.msra.mxu0 0
    %819 = vmatprep.subr.bf16.mxu0 0
    %820 = vmatpush1.bf16.msra.mxu0 0
    %821 = vmatprep.subr.bf16.mxu0 0
    %822 = vmatpush1.bf16.msra.mxu0 0
    %823 = vmatprep.subr.bf16.mxu0 0
    %824 = vmatpush1.bf16.msra.mxu0 0
    %825 = vmatprep.subr.bf16.mxu0 0
    %826 = vmatpush1.bf16.msra.mxu0 0
    %827 = vmatprep.subr.bf16.mxu0 0
    %828 = vmatpush1.bf16.msra.mxu0 0
    %829 = vmatprep.subr.bf16.mxu0 0
    %830 = vmatpush1.bf16.msra.mxu0 0
    %831 = vmatprep.subr.bf16.mxu0 0
    %832 = vmatpush1.bf16.msra.mxu0 0
    %833 = vmatprep.mubr.bf16.mxu0 0
    %834 = vmatmul.mubr.bf16.gmra.mrb[0].mxu0 %v796
    %v835 = vpop.f32.mrb[0].mxu0
    %v836 = vadd.f32 0.0, %v835
    %v837 = vpop.f32.mrb[0].mxu0
    %v838 = vpop.f32.mrb[0].mxu0
    %v839 = vpop.f32.mrb[0].mxu0
    %840 = vdwg.mxu0
    %841 = vrot.lane.b32.xlu0 %v155, 64
    %v842 = vpop.permute.xlu0 %841
    %v844 = vsel %vm162, %v644, 0
    %v847 = vsel %vm653, %v842, 0
    %849 = vmatprep.subr.bf16.mxu0 0
    %850 = vmatpush1.bf16.msra.mxu0 %v847
    %851 = vmatprep.subr.bf16.mxu0 0
    %852 = vmatpush1.bf16.msra.mxu0 0
    %853 = vmatprep.subr.bf16.mxu0 0
    %854 = vmatpush1.bf16.msra.mxu0 0
    %855 = vmatprep.subr.bf16.mxu0 0
    %856 = vmatpush1.bf16.msra.mxu0 0
    %857 = vmatprep.subr.bf16.mxu0 0
    %858 = vmatpush1.bf16.msra.mxu0 0
    %859 = vmatprep.subr.bf16.mxu0 0
    %860 = vmatpush1.bf16.msra.mxu0 0
    %861 = vmatprep.subr.bf16.mxu0 0
    %862 = vmatpush1.bf16.msra.mxu0 0
    %863 = vmatprep.subr.bf16.mxu0 0
    %864 = vmatpush1.bf16.msra.mxu0 0
    %865 = vmatprep.subr.bf16.mxu0 0
    %866 = vmatpush1.bf16.msra.mxu0 0
    %867 = vmatprep.subr.bf16.mxu0 0
    %868 = vmatpush1.bf16.msra.mxu0 0
    %869 = vmatprep.subr.bf16.mxu0 0
    %870 = vmatpush1.bf16.msra.mxu0 0
    %871 = vmatprep.subr.bf16.mxu0 0
    %872 = vmatpush1.bf16.msra.mxu0 0
    %873 = vmatprep.subr.bf16.mxu0 0
    %874 = vmatpush1.bf16.msra.mxu0 0
    %875 = vmatprep.subr.bf16.mxu0 0
    %876 = vmatpush1.bf16.msra.mxu0 0
    %877 = vmatprep.subr.bf16.mxu0 0
    %878 = vmatpush1.bf16.msra.mxu0 0
    %879 = vmatprep.subr.bf16.mxu0 0
    %880 = vmatpush1.bf16.msra.mxu0 0
    %881 = vmatprep.mubr.bf16.mxu0 0
    %882 = vmatmul.mubr.bf16.gmra.mrb[0].mxu0 %v844
    %v883 = vpop.f32.mrb[0].mxu0
    %v884 = vadd.f32 0.0, %v883
    %v885 = vpop.f32.mrb[0].mxu0
    %v886 = vpop.f32.mrb[0].mxu0
    %v887 = vpop.f32.mrb[0].mxu0
    %888 = vdwg.mxu0
    %889 = vrot.lane.b32.xlu0 %v156, 64
    %v890 = vpop.permute.xlu0 %889
    %v892 = vsel %vm162, %v645, 0
    %v895 = vsel %vm653, %v890, 0
    %897 = vmatprep.subr.bf16.mxu0 0
    %898 = vmatpush1.bf16.msra.mxu0 %v895
    %899 = vmatprep.subr.bf16.mxu0 0
    %900 = vmatpush1.bf16.msra.mxu0 0
    %901 = vmatprep.subr.bf16.mxu0 0
    %902 = vmatpush1.bf16.msra.mxu0 0
    %903 = vmatprep.subr.bf16.mxu0 0
    %904 = vmatpush1.bf16.msra.mxu0 0
    %905 = vmatprep.subr.bf16.mxu0 0
    %906 = vmatpush1.bf16.msra.mxu0 0
    %907 = vmatprep.subr.bf16.mxu0 0
    %908 = vmatpush1.bf16.msra.mxu0 0
    %909 = vmatprep.subr.bf16.mxu0 0
    %910 = vmatpush1.bf16.msra.mxu0 0
    %911 = vmatprep.subr.bf16.mxu0 0
    %912 = vmatpush1.bf16.msra.mxu0 0
    %913 = vmatprep.subr.bf16.mxu0 0
    %914 = vmatpush1.bf16.msra.mxu0 0
    %915 = vmatprep.subr.bf16.mxu0 0
    %916 = vmatpush1.bf16.msra.mxu0 0
    %917 = vmatprep.subr.bf16.mxu0 0
    %918 = vmatpush1.bf16.msra.mxu0 0
    %919 = vmatprep.subr.bf16.mxu0 0
    %920 = vmatpush1.bf16.msra.mxu0 0
    %921 = vmatprep.subr.bf16.mxu0 0
    %922 = vmatpush1.bf16.msra.mxu0 0
    %923 = vmatprep.subr.bf16.mxu0 0
    %924 = vmatpush1.bf16.msra.mxu0 0
    %925 = vmatprep.subr.bf16.mxu0 0
    %926 = vmatpush1.bf16.msra.mxu0 0
    %927 = vmatprep.subr.bf16.mxu0 0
    %928 = vmatpush1.bf16.msra.mxu0 0
    %929 = vmatprep.mubr.bf16.mxu0 0
    %930 = vmatmul.mubr.bf16.gmra.mrb[0].mxu0 %v892
    %v931 = vpop.f32.mrb[0].mxu0
    %v932 = vadd.f32 0.0, %v931
    %v933 = vpop.f32.mrb[0].mxu0
    %v934 = vpop.f32.mrb[0].mxu0
    %v935 = vpop.f32.mrb[0].mxu0
    %936 = vdwg.mxu0
    %937 = vrot.lane.b32.xlu0 %v157, 64
    %v938 = vpop.permute.xlu0 %937
    %v940 = vsel %vm162, %v646, 0
    %v943 = vsel %vm653, %v938, 0
    %945 = vmatprep.subr.bf16.mxu0 0
    %946 = vmatpush1.bf16.msra.mxu0 %v943
    %947 = vmatprep.subr.bf16.mxu0 0
    %948 = vmatpush1.bf16.msra.mxu0 0
    %949 = vmatprep.subr.bf16.mxu0 0
    %950 = vmatpush1.bf16.msra.mxu0 0
    %951 = vmatprep.subr.bf16.mxu0 0
    %952 = vmatpush1.bf16.msra.mxu0 0
    %953 = vmatprep.subr.bf16.mxu0 0
    %954 = vmatpush1.bf16.msra.mxu0 0
    %955 = vmatprep.subr.bf16.mxu0 0
    %956 = vmatpush1.bf16.msra.mxu0 0
    %957 = vmatprep.subr.bf16.mxu0 0
    %958 = vmatpush1.bf16.msra.mxu0 0
    %959 = vmatprep.subr.bf16.mxu0 0
    %960 = vmatpush1.bf16.msra.mxu0 0
    %961 = vmatprep.subr.bf16.mxu0 0
    %962 = vmatpush1.bf16.msra.mxu0 0
    %963 = vmatprep.subr.bf16.mxu0 0
    %964 = vmatpush1.bf16.msra.mxu0 0
    %965 = vmatprep.subr.bf16.mxu0 0
    %966 = vmatpush1.bf16.msra.mxu0 0
    %967 = vmatprep.subr.bf16.mxu0 0
    %968 = vmatpush1.bf16.msra.mxu0 0
    %969 = vmatprep.subr.bf16.mxu0 0
    %970 = vmatpush1.bf16.msra.mxu0 0
    %971 = vmatprep.subr.bf16.mxu0 0
    %972 = vmatpush1.bf16.msra.mxu0 0
    %973 = vmatprep.subr.bf16.mxu0 0
    %974 = vmatpush1.bf16.msra.mxu0 0
    %975 = vmatprep.subr.bf16.mxu0 0
    %976 = vmatpush1.bf16.msra.mxu0 0
    %977 = vmatprep.mubr.bf16.mxu0 0
    %978 = vmatmul.mubr.bf16.gmra.mrb[0].mxu0 %v940
    %v979 = vpop.f32.mrb[0].mxu0
    %v980 = vadd.f32 0.0, %v979
    %v981 = vpop.f32.mrb[0].mxu0
    %v982 = vpop.f32.mrb[0].mxu0
    %v983 = vpop.f32.mrb[0].mxu0
    %984 = vdwg.mxu0
    %985 = vrot.lane.b32.xlu0 %v158, 64
    %v986 = vpop.permute.xlu0 %985
    %v988 = vsel %vm162, %v647, 0
    %v991 = vsel %vm653, %v986, 0
    %993 = vmatprep.subr.bf16.mxu0 0
    %994 = vmatpush1.bf16.msra.mxu0 %v991
    %995 = vmatprep.subr.bf16.mxu0 0
    %996 = vmatpush1.bf16.msra.mxu0 0
    %997 = vmatprep.subr.bf16.mxu0 0
    %998 = vmatpush1.bf16.msra.mxu0 0
    %999 = vmatprep.subr.bf16.mxu0 0
    %1000 = vmatpush1.bf16.msra.mxu0 0
    %1001 = vmatprep.subr.bf16.mxu0 0
    %1002 = vmatpush1.bf16.msra.mxu0 0
    %1003 = vmatprep.subr.bf16.mxu0 0
    %1004 = vmatpush1.bf16.msra.mxu0 0
    %1005 = vmatprep.subr.bf16.mxu0 0
    %1006 = vmatpush1.bf16.msra.mxu0 0
    %1007 = vmatprep.subr.bf16.mxu0 0
    %1008 = vmatpush1.bf16.msra.mxu0 0
    %1009 = vmatprep.subr.bf16.mxu0 0
    %1010 = vmatpush1.bf16.msra.mxu0 0
    %1011 = vmatprep.subr.bf16.mxu0 0
    %1012 = vmatpush1.bf16.msra.mxu0 0
    %1013 = vmatprep.subr.bf16.mxu0 0
    %1014 = vmatpush1.bf16.msra.mxu0 0
    %1015 = vmatprep.subr.bf16.mxu0 0
    %1016 = vmatpush1.bf16.msra.mxu0 0
    %1017 = vmatprep.subr.bf16.mxu0 0
    %1018 = vmatpush1.bf16.msra.mxu0 0
    %1019 = vmatprep.subr.bf16.mxu0 0
    %1020 = vmatpush1.bf16.msra.mxu0 0
    %1021 = vmatprep.subr.bf16.mxu0 0
    %1022 = vmatpush1.bf16.msra.mxu0 0
    %1023 = vmatprep.subr.bf16.mxu0 0
    %1024 = vmatpush1.bf16.msra.mxu0 0
    %1025 = vmatprep.mubr.bf16.mxu0 0
    %1026 = vmatmul.mubr.bf16.gmra.mrb[0].mxu0 %v988
    %v1027 = vpop.f32.mrb[0].mxu0
    %v1028 = vadd.f32 0.0, %v1027
    %v1029 = vpop.f32.mrb[0].mxu0
    %v1030 = vpop.f32.mrb[0].mxu0
    %v1031 = vpop.f32.mrb[0].mxu0
    %1032 = vdwg.mxu0
    %1035 = vrot.lane.b32.xlu0 %v788, 8
    %v1036 = vpop.permute.xlu0 %1035
    %1037 = vrot.lane.b32.xlu0 %v836, 8
    %v1038 = vpop.permute.xlu0 %1037
    %1043 = vrot.lane.b32.xlu0 %v884, 16
    %v1044 = vpop.permute.xlu0 %1043
    %1045 = vrot.lane.b32.xlu0 %v932, 16
    %v1046 = vpop.permute.xlu0 %1045
    %1051 = vrot.lane.b32.xlu0 %v980, 24
    %v1052 = vpop.permute.xlu0 %1051
    %1053 = vrot.lane.b32.xlu0 %v1028, 24
    %v1054 = vpop.permute.xlu0 %1053
    %v1057 = vsel %vm162, %v692, %v1036
    %v1058 = vsel %vm162, %v740, %v1038
    %vm1059 = vcmask 130048
    %v1060 = vsel %vm1059, %v1057, %v1044
    %v1061 = vsel %vm1059, %v1058, %v1046
    %vm1062 = vcmask 195584
    %v1063 = vsel %vm1062, %v1060, %v1052
    %v1064 = vsel %vm1062, %v1061, %v1054
    %v1065 = vpack.c.bf16 %v1064, %v1063
    %v1066 = vld [vmem:[%s3] sm:$0xf]
    %v1067 = vld [vmem:[%s3 + $0x4] sm:$0xf]
    %v1068 = vld [vmem:[%s3 + $0x8] sm:$0xf]
    %v1069 = vld [vmem:[%s3 + $0xc] sm:$0xf]
    %v1070 = vld [vmem:[%s4] sm:$0x1]
    %v1072 = vlaneseq
    %v1073 = vshrl.u32 %v1072, 7
    %v1074 = vsub.s32 0, %v1073
    %v1075 = vrot.slane %v1070, %v1074
    %v1081 = vunpack.c.l.b16 %v1066
    %v1082 = vunpack.c.l.b16 %v1067
    %v1083 = vunpack.c.l.b16 %v1068
    %v1084 = vunpack.c.l.b16 %v1069
    %v1085 = vpack.c.b16 %v1082, %v1081
    %v1086 = vpack.c.b16 %v1084, %v1083
    %v1090 = vsel %vm86, %v1065, 0
    %1092 = vmatprep.subr.bf16.mxu0 0
    %1093 = vmatpush1.bf16.msra.mxu0 %v1085
    %1094 = vmatprep.subr.bf16.mxu0 0
    %1095 = vmatpush1.bf16.msra.mxu0 %v1086
    %1096 = vmatprep.subr.bf16.mxu0 0
    %1097 = vmatpush1.bf16.msra.mxu0 0
    %1098 = vmatprep.subr.bf16.mxu0 0
    %1099 = vmatpush1.bf16.msra.mxu0 0
    %1100 = vmatprep.subr.bf16.mxu0 0
    %1101 = vmatpush1.bf16.msra.mxu0 0
    %1102 = vmatprep.subr.bf16.mxu0 0
    %1103 = vmatpush1.bf16.msra.mxu0 0
    %1104 = vmatprep.subr.bf16.mxu0 0
    %1105 = vmatpush1.bf16.msra.mxu0 0
    %1106 = vmatprep.subr.bf16.mxu0 0
    %1107 = vmatpush1.bf16.msra.mxu0 0
    %1108 = vmatprep.subr.bf16.mxu0 0
    %1109 = vmatpush1.bf16.msra.mxu0 0
    %1110 = vmatprep.subr.bf16.mxu0 0
    %1111 = vmatpush1.bf16.msra.mxu0 0
    %1112 = vmatprep.subr.bf16.mxu0 0
    %1113 = vmatpush1.bf16.msra.mxu0 0
    %1114 = vmatprep.subr.bf16.mxu0 0
    %1115 = vmatpush1.bf16.msra.mxu0 0
    %1116 = vmatprep.subr.bf16.mxu0 0
    %1117 = vmatpush1.bf16.msra.mxu0 0
    %1118 = vmatprep.subr.bf16.mxu0 0
    %1119 = vmatpush1.bf16.msra.mxu0 0
    %1120 = vmatprep.subr.bf16.mxu0 0
    %1121 = vmatpush1.bf16.msra.mxu0 0
    %1122 = vmatprep.subr.bf16.mxu0 0
    %1123 = vmatpush1.bf16.msra.mxu0 0
    %1124 = vmatprep.mubr.bf16.mxu0 0
    %1125 = vmatmul.mubr.bf16.gmra.mrb[0].mxu0 %v1090
    %v1126 = vpop.f32.mrb[0].mxu0
    %v1127 = vadd.f32 %v1075, %v1126
    %v1128 = vpop.f32.mrb[0].mxu0
    %v1129 = vpop.f32.mrb[0].mxu0
    %v1130 = vadd.f32 %v1075, %v1129
    %v1131 = vpop.f32.mrb[0].mxu0
    %1132 = vdwg.mxu0
    %v1133 = vadd.f32 %v60, %v1127
    %v1134 = vadd.f32 %v61, %v1130
    %v1135 = vld [vmem:[%s9] sm:$0x1]
    %v1136 = vld [vmem:[%s10] sm:$0x1]
    %v1137 = vsel %vm86, %v1133, 0.0
    %1138 = vadd.xlane.f32.xlu0 %v1137
    %v1139 = vpop.xlane.xlu0 %1138
    %v1140 = vsel %vm86, %v1134, 0.0
    %1141 = vadd.xlane.f32.xlu0 %v1140
    %v1142 = vpop.xlane.xlu0 %1141
    %v1143 = vrcp.pop 32.0
    %v1144 = vmul.f32 %v1139, %v1143
    %v1145 = vmul.f32 %v1142, %v1143
    %v1146 = vmul.f32 %v1133, %v1133
    %v1147 = vmul.f32 %v1134, %v1134
    %v1148 = vsel %vm86, %v1146, 0.0
    %1149 = vadd.xlane.f32.xlu0 %v1148
    %v1150 = vpop.xlane.xlu0 %1149
    %v1151 = vsel %vm86, %v1147, 0.0
    %1152 = vadd.xlane.f32.xlu0 %v1151
    %v1153 = vpop.xlane.xlu0 %1152
    %v1154 = vmul.f32 %v1150, %v1143
    %v1155 = vmul.f32 %v1153, %v1143
    %v1156 = vmul.f32 %v1144, %v1144
    %v1157 = vmul.f32 %v1145, %v1145
    %v1158 = vsub.f32 %v1154, %v1156
    %v1159 = vsub.f32 %v1155, %v1157
    %v1160 = vsub.f32 %v1133, %v1144
    %v1161 = vsub.f32 %v1134, %v1145
    %v1162 = vadd.f32 %v1158, 1e-05
    %v1163 = vadd.f32 %v1159, 1e-05
    %v1164 = vrsqrt.pop %v1162
    %v1165 = vrsqrt.pop %v1163
    %v1166 = vmul.f32 %v1160, %v1164
    %v1167 = vmul.f32 %v1161, %v1165
    %v1169 = vlaneseq
    %v1170 = vshrl.u32 %v1169, 7
    %v1171 = vsub.s32 0, %v1170
    %v1172 = vrot.slane %v1135, %v1171
    %v1174 = vmul.f32 %v1166, %v1172
    %v1175 = vmul.f32 %v1167, %v1172
    %v1177 = vlaneseq
    %v1178 = vshrl.u32 %v1177, 7
    %v1179 = vsub.s32 0, %v1178
    %v1180 = vrot.slane %v1136, %v1179
    %v1182 = vadd.f32 %v1174, %v1180
    %v1183 = vadd.f32 %v1175, %v1180
    %v1184 = vpack.c.bf16 %v1183, %v1182
    %v1185 = vld [vmem:[#allocation2] sm:$0xf]
    %v1186 = vld [vmem:[#allocation2 + $0x4] sm:$0xf]
    %v1187 = vld [vmem:[#allocation2 + $0x8] sm:$0xf]
    %v1188 = vld [vmem:[#allocation2 + $0xc] sm:$0xf]
    %v1189 = vld [vmem:[%s6] sm:$0x1]
    %v1191 = vlaneseq
    %v1192 = vshrl.u32 %v1191, 7
    %v1193 = vsub.s32 0, %v1192
    %v1194 = vrot.slane %v1189, %v1193
    %v1200 = vunpack.c.l.b16 %v1185
    %v1201 = vunpack.c.l.b16 %v1186
    %v1202 = vunpack.c.l.b16 %v1187
    %v1203 = vunpack.c.l.b16 %v1188
    %v1204 = vpack.c.b16 %v1201, %v1200
    %v1205 = vpack.c.b16 %v1203, %v1202
    %v1209 = vsel %vm86, %v1184, 0
    %1211 = vmatprep.subr.bf16.mxu0 0
    %1212 = vmatpush1.bf16.msra.mxu0 %v1204
    %1213 = vmatprep.subr.bf16.mxu0 0
    %1214 = vmatpush1.bf16.msra.mxu0 %v1205
    %1215 = vmatprep.subr.bf16.mxu0 0
    %1216 = vmatpush1.bf16.msra.mxu0 0
    %1217 = vmatprep.subr.bf16.mxu0 0
    %1218 = vmatpush1.bf16.msra.mxu0 0
    %1219 = vmatprep.subr.bf16.mxu0 0
    %1220 = vmatpush1.bf16.msra.mxu0 0
    %1221 = vmatprep.subr.bf16.mxu0 0
    %1222 = vmatpush1.bf16.msra.mxu0 0
    %1223 = vmatprep.subr.bf16.mxu0 0
    %1224 = vmatpush1.bf16.msra.mxu0 0
    %1225 = vmatprep.subr.bf16.mxu0 0
    %1226 = vmatpush1.bf16.msra.mxu0 0
    %1227 = vmatprep.subr.bf16.mxu0 0
    %1228 = vmatpush1.bf16.msra.mxu0 0
    %1229 = vmatprep.subr.bf16.mxu0 0
    %1230 = vmatpush1.bf16.msra.mxu0 0
    %1231 = vmatprep.subr.bf16.mxu0 0
    %1232 = vmatpush1.bf16.msra.mxu0 0
    %1233 = vmatprep.subr.bf16.mxu0 0
    %1234 = vmatpush1.bf16.msra.mxu0 0
    %1235 = vmatprep.subr.bf16.mxu0 0
    %1236 = vmatpush1.bf16.msra.mxu0 0
    %1237 = vmatprep.subr.bf16.mxu0 0
    %1238 = vmatpush1.bf16.msra.mxu0 0
    %1239 = vmatprep.subr.bf16.mxu0 0
    %1240 = vmatpush1.bf16.msra.mxu0 0
    %1241 = vmatprep.subr.bf16.mxu0 0
    %1242 = vmatpush1.bf16.msra.mxu0 0
    %1243 = vmatprep.mubr.bf16.mxu0 0
    %1244 = vmatmul.mubr.bf16.gmra.mrb[0].mxu0 %v1209
    %v1245 = vpop.f32.mrb[0].mxu0
    %v1246 = vadd.f32 %v1194, %v1245
    %v1247 = vpop.f32.mrb[0].mxu0
    %v1248 = vpop.f32.mrb[0].mxu0
    %v1249 = vadd.f32 %v1194, %v1248
    %v1250 = vpop.f32.mrb[0].mxu0
    %1251 = vdwg.mxu0
    %v1252 = vmax.f32 %v1246, 0.0
    %v1253 = vmax.f32 %v1249, 0.0
    %v1254 = vpack.c.bf16 %v1253, %v1252
    %v1255 = vld [vmem:[%s7] sm:$0xf]
    %v1256 = vld [vmem:[%s7 + $0x4] sm:$0xf]
    %v1257 = vld [vmem:[%s7 + $0x8] sm:$0xf]
    %v1258 = vld [vmem:[%s7 + $0xc] sm:$0xf]
    %v1259 = vld [vmem:[%s7 + $0x10] sm:$0xf]
    %v1260 = vld [vmem:[%s7 + $0x14] sm:$0xf]
    %v1261 = vld [vmem:[%s7 + $0x18] sm:$0xf]
    %v1262 = vld [vmem:[%s7 + $0x1c] sm:$0xf]
    %v1263 = vld [vmem:[%s8] sm:$0x1]
    %v1265 = vlaneseq
    %v1266 = vshrl.u32 %v1265, 7
    %v1267 = vsub.s32 0, %v1266
    %v1268 = vrot.slane %v1263, %v1267
    %v1278 = vunpack.c.l.b16 %v1255
    %v1279 = vunpack.c.l.b16 %v1256
    %v1280 = vunpack.c.l.b16 %v1257
    %v1281 = vunpack.c.l.b16 %v1258
    %v1282 = vunpack.c.l.b16 %v1259
    %v1283 = vunpack.c.l.b16 %v1260
    %v1284 = vunpack.c.l.b16 %v1261
    %v1285 = vunpack.c.l.b16 %v1262
    %v1286 = vpack.c.b16 %v1279, %v1278
    %v1287 = vpack.c.b16 %v1281, %v1280
    %v1288 = vpack.c.b16 %v1283, %v1282
    %v1289 = vpack.c.b16 %v1285, %v1284
    %vm1294 = vcmask 523264
    %v1296 = vsel %vm1294, %v1254, 0
    %1298 = vmatprep.subr.bf16.mxu0 0
    %1299 = vmatpush1.bf16.msra.mxu0 %v1286
    %1300 = vmatprep.subr.bf16.mxu0 0
    %1301 = vmatpush1.bf16.msra.mxu0 %v1287
    %1302 = vmatprep.subr.bf16.mxu0 0
    %1303 = vmatpush1.bf16.msra.mxu0 %v1288
    %1304 = vmatprep.subr.bf16.mxu0 0
    %1305 = vmatpush1.bf16.msra.mxu0 %v1289
    %1306 = vmatprep.subr.bf16.mxu0 0
    %1307 = vmatpush1.bf16.msra.mxu0 0
    %1308 = vmatprep.subr.bf16.mxu0 0
    %1309 = vmatpush1.bf16.msra.mxu0 0
    %1310 = vmatprep.subr.bf16.mxu0 0
    %1311 = vmatpush1.bf16.msra.mxu0 0
    %1312 = vmatprep.subr.bf16.mxu0 0
    %1313 = vmatpush1.bf16.msra.mxu0 0
    %1314 = vmatprep.subr.bf16.mxu0 0
    %1315 = vmatpush1.bf16.msra.mxu0 0
    %1316 = vmatprep.subr.bf16.mxu0 0
    %1317 = vmatpush1.bf16.msra.mxu0 0
    %1318 = vmatprep.subr.bf16.mxu0 0
    %1319 = vmatpush1.bf16.msra.mxu0 0
    %1320 = vmatprep.subr.bf16.mxu0 0
    %1321 = vmatpush1.bf16.msra.mxu0 0
    %1322 = vmatprep.subr.bf16.mxu0 0
    %1323 = vmatpush1.bf16.msra.mxu0 0
    %1324 = vmatprep.subr.bf16.mxu0 0
    %1325 = vmatpush1.bf16.msra.mxu0 0
    %1326 = vmatprep.subr.bf16.mxu0 0
    %1327 = vmatpush1.bf16.msra.mxu0 0
    %1328 = vmatprep.subr.bf16.mxu0 0
    %1329 = vmatpush1.bf16.msra.mxu0 0
    %1330 = vmatprep.mubr.bf16.mxu0 0
    %1331 = vmatmul.mubr.bf16.gmra.mrb[0].mxu0 %v1296
    %v1332 = vpop.f32.mrb[0].mxu0
    %v1333 = vadd.f32 %v1268, %v1332
    %v1334 = vpop.f32.mrb[0].mxu0
    %v1335 = vpop.f32.mrb[0].mxu0
    %v1336 = vadd.f32 %v1268, %v1335
    %v1337 = vpop.f32.mrb[0].mxu0
    %1338 = vdwg.mxu0
    %v1339 = vadd.f32 %v1182, %v1333
    %v1340 = vadd.f32 %v1183, %v1336
    %v1341 = vld [vmem:[%s11] sm:$0x1]
    %v1342 = vld [vmem:[%s12] sm:$0x1]
    %v1343 = vsel %vm86, %v1339, 0.0
    %1344 = vadd.xlane.f32.xlu0 %v1343
    %v1345 = vpop.xlane.xlu0 %1344
    %v1346 = vsel %vm86, %v1340, 0.0
    %1347 = vadd.xlane.f32.xlu0 %v1346
    %v1348 = vpop.xlane.xlu0 %1347
    %v1349 = vmul.f32 %v1345, %v1143
    %v1350 = vmul.f32 %v1348, %v1143
    %v1351 = vmul.f32 %v1339, %v1339
    %v1352 = vmul.f32 %v1340, %v1340
    %v1353 = vsel %vm86, %v1351, 0.0
    %1354 = vadd.xlane.f32.xlu0 %v1353
    %v1355 = vpop.xlane.xlu0 %1354
    %v1356 = vsel %vm86, %v1352, 0.0
    %1357 = vadd.xlane.f32.xlu0 %v1356
    %v1358 = vpop.xlane.xlu0 %1357
    %v1359 = vmul.f32 %v1355, %v1143
    %v1360 = vmul.f32 %v1358, %v1143
    %v1361 = vmul.f32 %v1349, %v1349
    %v1362 = vmul.f32 %v1350, %v1350
    %v1363 = vsub.f32 %v1359, %v1361
    %v1364 = vsub.f32 %v1360, %v1362
    %v1365 = vsub.f32 %v1339, %v1349
    %v1366 = vsub.f32 %v1340, %v1350
    %v1367 = vadd.f32 %v1363, 1e-05
    %v1368 = vadd.f32 %v1364, 1e-05
    %v1369 = vrsqrt.pop %v1367
    %v1370 = vrsqrt.pop %v1368
    %v1371 = vmul.f32 %v1365, %v1369
    %v1372 = vmul.f32 %v1366, %v1370
    %v1374 = vlaneseq
    %v1375 = vshrl.u32 %v1374, 7
    %v1376 = vsub.s32 0, %v1375
    %v1377 = vrot.slane %v1341, %v1376
    %v1379 = vmul.f32 %v1371, %v1377
    %v1380 = vmul.f32 %v1372, %v1377
    %v1382 = vlaneseq
    %v1383 = vshrl.u32 %v1382, 7
    %v1384 = vsub.s32 0, %v1383
    %v1385 = vrot.slane %v1342, %v1384
    %v1387 = vadd.f32 %v1379, %v1385
    %v1388 = vadd.f32 %v1380, %v1385
    %1389 = vst.msk [vmem:[#allocation5] sm:$0xff] %vm86, %v1387
    %1390 = vst.msk [vmem:[#allocation5 + $0x8] sm:$0xff] %vm86, %v1388
    // Predicated region
    $region58: #{transformer_layer.1} parent=1 // pred_check
      _
    $region59: #{transformer_layer.1} parent=1 // pred_check_branch
      %1392 = sbr.rel (0) target = $region61
    $region60: #{transformer_layer.1} parent=1 // pred_region
      %s1394 = ssub.s32 256, 256
      %1395 = vsyncadd [#allocation4], %s1394
      %s1396 = sshll.u32 [#allocation5], 4
      %s1397 = int_to_ptr.vmem [resolvable:$true] %s1396
      %1402 = dma.vmem_to_hbm [thread:$0]  %s1397, 256, %s13, [#allocation4], 128, 128, 8
    $region61: #{transformer_layer.1} parent=1 // pred_fallthru
      _
    // Predicated region
    $region62: #{transformer_layer.1} parent=1 // pred_check
      _
    $region63: #{transformer_layer.1} parent=1 // pred_check_branch
      %1404 = sbr.rel (0) target = $region65
    $region64: #{transformer_layer.1} parent=1 // pred_region
      %1405 = dma.done [#allocation4], 256
    $region65: #{transformer_layer.1} parent=1 // pred_fallthru
      _
    %1406 = vsyncpa [#allocation3], 1
    %1407 = vsyncpa [#allocation4], 1

</llo_original>
